<compile_context>
chip_gen: v7x
topology: tpu7x:2x2x1
jax: 0.10.0
libtpu: 0.0.40
codegen_flags: <defaults>
</compile_context>

<pallas_src>
import functools

import jax
import jax.numpy as jnp
from jax.experimental import pallas as pl
from jax.experimental.pallas import tpu as pltpu

# ---- small, forward-consistent hyperparameters (module defaults scaled down) ----
EMBED_DIM = 32          # D   (module default 300)
KERNEL_NUM = 8          # Co  (module default 100)
KERNEL_SIZES = (3, 4, 5)
OUTPUT_SIZE = 2         # C
VOCAB_SIZE = 1000       # module default 100000
BATCH = 16              # N
SEQ_LEN = 16            # W

# ---- lane/sublane padding targets ----
D_PAD = 128             # embedding dim padded to one full lane row
CO3 = 128               # ALL THREE branches packed into one 128-lane block (3*Co = 24 real)
C_PAD = 128             # logits padded to a full lane row (unmasked vst)
K_MAX = max(KERNEL_SIZES)
TILE_N = 16             # whole batch in one grid step (M = T_PAD*TILE_N = 256 MXU rows)


def _round_up(x, m):
    return (x + m - 1) // m * m


def _cnn_text_kernel(x_ref, wconv_ref, bconv_ref, fcw_ref, fcb_ref, out_ref,
                     *, seq_len, t_pad):
    k_max, d_pad, co3 = wconv_ref.shape
    _, tile_n, _ = x_ref.shape

    # Shifted-slice conv: acc += (T_PAD*TILE_N, D_PAD) @ (D_PAD, CO3) per tap, f32 acc.
    x = x_ref[...]                                              # (w_pad, tile_n, d_pad) bf16
    acc = None
    for k in range(k_max):                                      # static unroll, K_MAX = 5
        xk = x[k:k + t_pad].reshape(t_pad * tile_n, d_pad)      # layout-preserving
        part = jnp.dot(xk, wconv_ref[k], preferred_element_type=jnp.float32)
        acc = part if acc is None else acc + part
    conv = acc.reshape(t_pad, tile_n, co3)                      # (t_pad, tile_n, co3) f32

    # Bias + ReLU in f32 (v5e-safe elementwise path).
    conv = jnp.maximum(conv + bconv_ref[...], 0.0)

    # In-kernel per-branch time-validity mask (column ranges of the packed 128-lane block).
    # Zero-masking is exact only because it follows ReLU (outputs >= 0).
    t_iota = jax.lax.broadcasted_iota(jnp.int32, (t_pad, tile_n, co3), 0)
    c_iota = jax.lax.broadcasted_iota(jnp.int32, (t_pad, tile_n, co3), 2)
    valid = jnp.zeros((t_pad, tile_n, co3), jnp.int32)
    for b, ks in enumerate(KERNEL_SIZES):
        in_b = (c_iota >= b * KERNEL_NUM) & (c_iota < (b + 1) * KERNEL_NUM)
        valid = jnp.where(in_b, seq_len - ks + 1, valid)
    conv = jnp.where(t_iota < valid, conv, 0.0)

    # Max over the LEADING time axis: elementwise maxes of (tile_n, co3) slabs (VPU only).
    pooled = jnp.max(conv, axis=0)                              # (tile_n, co3) f32

    # TODO(synk): dropout treated as identity (eval mode); train-mode masking not applied.

    # Fused FC in f32 (tiny; avoids bf16 rounding). concat(p3,p4,p5) is implicit in the
    # packed channel layout; padded rows of fcw are zero.
    logits = jnp.dot(pooled, fcw_ref[...],
                     preferred_element_type=jnp.float32) + fcb_ref[...]
    out_ref[...] = logits.astype(out_ref.dtype)


def pack_params(params):
    """Fuse + pack the conv/fc weights once (branches share one 128-lane block)."""
    d, co, c = EMBED_DIM, KERNEL_NUM, OUTPUT_SIZE
    assert len(KERNEL_SIZES) * co <= CO3

    wconv = jnp.zeros((K_MAX, D_PAD, CO3), jnp.float32)
    bconv = jnp.zeros((1, CO3), jnp.float32)
    fcw = jnp.zeros((CO3, C_PAD), jnp.float32)
    for b, ks in enumerate(KERNEL_SIZES):
        wconv = wconv.at[:ks, :d, b * co:(b + 1) * co].set(params[f"w{ks}"])
        bconv = bconv.at[0, b * co:(b + 1) * co].set(params[f"b{ks}"][0])
        fcw = fcw.at[b * co:(b + 1) * co, :c].set(
            params["fc_w"][b * co:(b + 1) * co, :])
    fcb = jnp.zeros((1, C_PAD), jnp.float32).at[0, :c].set(params["fc_b"][0])
    return {
        "embed": params["embed"].astype(jnp.bfloat16),          # bf16 gather source
        "wconv": wconv.astype(jnp.bfloat16),                    # (K_MAX, D_PAD, CO3)
        "bconv": bconv,                                         # f32
        "fcw": fcw,                                             # f32 (tiny)
        "fcb": fcb,                                             # f32
    }


@jax.jit
def cnn_text_forward(tokens, packed):
    n, w = tokens.shape
    assert n % TILE_N == 0, "batch must be a multiple of TILE_N"
    t_pad = _round_up(w - min(KERNEL_SIZES) + 1, 8)             # longest valid conv length
    w_pad = t_pad + K_MAX - 1

    # Embedding gather straight into (W, N, D) layout, already bf16; pad time + lanes.
    # TODO(synk): fuse the gather into the kernel (scalar-prefetched ids + per-row DMA)
    # only once D reaches module scale (~300); at D=32 it would be descriptor-bound.
    x = jnp.take(packed["embed"], tokens.T, axis=0)             # (W, N, D) bf16
    x = jnp.pad(x, ((0, w_pad - w), (0, 0), (0, D_PAD - EMBED_DIM)))

    # Cost estimate reflects real (non-zero-padded) math; bytes reflect actual buffers.
    conv_flops = sum(2 * n * (w - ks + 1) * ks * EMBED_DIM * KERNEL_NUM
                     for ks in KERNEL_SIZES)
    fc_flops = 2 * n * len(KERNEL_SIZES) * KERNEL_NUM * OUTPUT_SIZE
    bytes_accessed = (x.size * 2 + packed["wconv"].size * 2
                      + (packed["bconv"].size + packed["fcw"].size
                         + packed["fcb"].size) * 4
                      + n * C_PAD * 4)
    cost = pl.CostEstimate(flops=conv_flops + fc_flops, transcendentals=0,
                           bytes_accessed=bytes_accessed)

    kernel = functools.partial(_cnn_text_kernel, seq_len=w, t_pad=t_pad)
    out = pl.pallas_call(
        kernel,
        out_shape=jax.ShapeDtypeStruct((n, C_PAD), jnp.float32),
        grid=(n // TILE_N,),                                    # (1,) at BATCH=16
        in_specs=[
            pl.BlockSpec((w_pad, TILE_N, D_PAD), lambda i: (0, i, 0)),   # embedded x
            pl.BlockSpec((K_MAX, D_PAD, CO3), lambda i: (0, 0, 0)),      # packed conv W
            pl.BlockSpec((1, CO3), lambda i: (0, 0)),                    # packed conv b
            pl.BlockSpec((CO3, C_PAD), lambda i: (0, 0)),                # fc W (f32)
            pl.BlockSpec((1, C_PAD), lambda i: (0, 0)),                  # fc b (f32)
        ],
        out_specs=pl.BlockSpec((TILE_N, C_PAD), lambda i: (i, 0)),
        compiler_params=pltpu.CompilerParams(
            dimension_semantics=("parallel",)),
        cost_estimate=cost,
    )(x, packed["wconv"], packed["bconv"], packed["fcw"], packed["fcb"])

    return out[:, :OUTPUT_SIZE]


def init_params(key):
    keys = jax.random.split(key, 9)
    d, co, c = EMBED_DIM, KERNEL_NUM, OUTPUT_SIZE
    return {
        "embed": jax.random.normal(keys[0], (VOCAB_SIZE, d), jnp.float32),
        "w3": 0.05 * jax.random.normal(keys[1], (3, d, co), jnp.float32),
        "b3": 0.05 * jax.random.normal(keys[2], (1, co), jnp.float32),
        "w4": 0.05 * jax.random.normal(keys[3], (4, d, co), jnp.float32),
        "b4": 0.05 * jax.random.normal(keys[4], (1, co), jnp.float32),
        "w5": 0.05 * jax.random.normal(keys[5], (5, d, co), jnp.float32),
        "b5": 0.05 * jax.random.normal(keys[6], (1, co), jnp.float32),
        "fc_w": 0.1 * jax.random.normal(keys[7], (3 * co, c), jnp.float32),
        "fc_b": 0.1 * jax.random.normal(keys[8], (1, c), jnp.float32),
    }


def reference_forward(tokens, params):
    """Pure-JAX f32 reference matching the PyTorch forward (dropout=identity)."""
    x = jnp.take(params["embed"], tokens, axis=0)               # (N, W, D)
    n, w_len, _ = x.shape
    feats = []
    for ks in KERNEL_SIZES:
        t = w_len - ks + 1
        conv = jnp.zeros((n, t, KERNEL_NUM), jnp.float32)
        for k in range(ks):
            conv = conv + jnp.einsum("ntd,dc->ntc", x[:, k:k + t, :],
                                     params[f"w{ks}"][k],
                                     preferred_element_type=jnp.float32)
        conv = jnp.maximum(conv + params[f"b{ks}"], 0.0)
        feats.append(jnp.max(conv, axis=1))                     # (N, Co)
    feat = jnp.concatenate(feats, axis=-1)                      # (N, 3*Co)
    return feat @ params["fc_w"] + params["fc_b"]               # (N, C)


if __name__ == "__main__":
    key = jax.random.PRNGKey(0)
    pkey, tkey = jax.random.split(key)
    params = init_params(pkey)
    packed = pack_params(params)
    tokens = jax.random.randint(tkey, (BATCH, SEQ_LEN), 0, VOCAB_SIZE,
                                dtype=jnp.int32)

    out = cnn_text_forward(tokens, packed)
    out = jax.block_until_ready(out)

    ref = reference_forward(tokens, params)
    assert out.shape == (BATCH, OUTPUT_SIZE), out.shape
    assert jnp.allclose(out, ref, rtol=3e-2, atol=3e-2), (out, ref)
    print("KERNEL_OK")
</pallas_src>

<mosaic_0001>
module attributes {stable_mosaic.version = 11 : i64} {
  func.func @_cnn_text_kernel(%arg0: i32, %arg1: memref<20x16x128xbf16, #tpu.memory_space<vmem>>, %arg2: memref<5x128x128xbf16, #tpu.memory_space<vmem>>, %arg3: memref<1x128xf32, #tpu.memory_space<vmem>>, %arg4: memref<128x128xf32, #tpu.memory_space<vmem>>, %arg5: memref<1x128xf32, #tpu.memory_space<vmem>>, %arg6: memref<16x128xf32, #tpu.memory_space<vmem>>) attributes {dimension_semantics = [#tpu.dimension_semantics<parallel>], iteration_bounds = array<i64: 1>, scalar_prefetch = 0 : i64, scratch_operands = 0 : i64, tpu.core_type = #tpu.core_type<tc>, window_params = [{transform_indices = @transform_0, window_bounds = array<i64: 20, 16, 128>}, {pipeline_mode = #tpu.pipeline_mode<synchronous>, transform_indices = @transform_1, window_bounds = array<i64: 5, 128, 128>}, {pipeline_mode = #tpu.pipeline_mode<synchronous>, transform_indices = @transform_2, window_bounds = array<i64: 1, 128>}, {pipeline_mode = #tpu.pipeline_mode<synchronous>, transform_indices = @transform_3, window_bounds = array<i64: 128, 128>}, {pipeline_mode = #tpu.pipeline_mode<synchronous>, transform_indices = @transform_4, window_bounds = array<i64: 1, 128>}, {transform_indices = @transform_5, window_bounds = array<i64: 16, 128>}]} {
    %c0 = arith.constant 0 : index
    %c0_0 = arith.constant 0 : index
    %c0_1 = arith.constant 0 : index
    %0 = vector.load %arg1[%c0, %c0_0, %c0_1] : memref<20x16x128xbf16, #tpu.memory_space<vmem>>, vector<20x16x128xbf16>
    %1 = vector.extract_strided_slice %0 {offsets = [0, 0, 0], sizes = [16, 16, 128], strides = [1, 1, 1]} : vector<20x16x128xbf16> to vector<16x16x128xbf16>
    %2 = vector.shape_cast %1 : vector<16x16x128xbf16> to vector<256x128xbf16>
    %c0_2 = arith.constant 0 : index
    %c0_3 = arith.constant 0 : index
    %c0_4 = arith.constant 0 : index
    %3 = vector.load %arg2[%c0_2, %c0_3, %c0_4] : memref<5x128x128xbf16, #tpu.memory_space<vmem>>, vector<1x128x128xbf16>
    %4 = vector.shape_cast %3 : vector<1x128x128xbf16> to vector<128x128xbf16>
    %cst = arith.constant dense<0.000000e+00> : vector<256x128xf32>
    %5 = tpu.matmul %2, %4, %cst {dimension_numbers = #tpu.dot_dimension_numbers<[1], [0], [0], [1], [0, 0, 1, 1], [], []>} : vector<256x128xbf16>, vector<128x128xbf16>, vector<256x128xf32> -> vector<256x128xf32>
    %6 = vector.extract_strided_slice %0 {offsets = [1, 0, 0], sizes = [16, 16, 128], strides = [1, 1, 1]} : vector<20x16x128xbf16> to vector<16x16x128xbf16>
    %7 = vector.shape_cast %6 : vector<16x16x128xbf16> to vector<256x128xbf16>
    %c1 = arith.constant 1 : index
    %c0_5 = arith.constant 0 : index
    %c0_6 = arith.constant 0 : index
    %8 = vector.load %arg2[%c1, %c0_5, %c0_6] : memref<5x128x128xbf16, #tpu.memory_space<vmem>>, vector<1x128x128xbf16>
    %9 = vector.shape_cast %8 : vector<1x128x128xbf16> to vector<128x128xbf16>
    %cst_7 = arith.constant dense<0.000000e+00> : vector<256x128xf32>
    %10 = tpu.matmul %7, %9, %cst_7 {dimension_numbers = #tpu.dot_dimension_numbers<[1], [0], [0], [1], [0, 0, 1, 1], [], []>} : vector<256x128xbf16>, vector<128x128xbf16>, vector<256x128xf32> -> vector<256x128xf32>
    %11 = arith.addf %5, %10 : vector<256x128xf32>
    %12 = vector.extract_strided_slice %0 {offsets = [2, 0, 0], sizes = [16, 16, 128], strides = [1, 1, 1]} : vector<20x16x128xbf16> to vector<16x16x128xbf16>
    %13 = vector.shape_cast %12 : vector<16x16x128xbf16> to vector<256x128xbf16>
    %c2 = arith.constant 2 : index
    %c0_8 = arith.constant 0 : index
    %c0_9 = arith.constant 0 : index
    %14 = vector.load %arg2[%c2, %c0_8, %c0_9] : memref<5x128x128xbf16, #tpu.memory_space<vmem>>, vector<1x128x128xbf16>
    %15 = vector.shape_cast %14 : vector<1x128x128xbf16> to vector<128x128xbf16>
    %cst_10 = arith.constant dense<0.000000e+00> : vector<256x128xf32>
    %16 = tpu.matmul %13, %15, %cst_10 {dimension_numbers = #tpu.dot_dimension_numbers<[1], [0], [0], [1], [0, 0, 1, 1], [], []>} : vector<256x128xbf16>, vector<128x128xbf16>, vector<256x128xf32> -> vector<256x128xf32>
    %17 = arith.addf %11, %16 : vector<256x128xf32>
    %18 = vector.extract_strided_slice %0 {offsets = [3, 0, 0], sizes = [16, 16, 128], strides = [1, 1, 1]} : vector<20x16x128xbf16> to vector<16x16x128xbf16>
    %19 = vector.shape_cast %18 : vector<16x16x128xbf16> to vector<256x128xbf16>
    %c3 = arith.constant 3 : index
    %c0_11 = arith.constant 0 : index
    %c0_12 = arith.constant 0 : index
    %20 = vector.load %arg2[%c3, %c0_11, %c0_12] : memref<5x128x128xbf16, #tpu.memory_space<vmem>>, vector<1x128x128xbf16>
    %21 = vector.shape_cast %20 : vector<1x128x128xbf16> to vector<128x128xbf16>
    %cst_13 = arith.constant dense<0.000000e+00> : vector<256x128xf32>
    %22 = tpu.matmul %19, %21, %cst_13 {dimension_numbers = #tpu.dot_dimension_numbers<[1], [0], [0], [1], [0, 0, 1, 1], [], []>} : vector<256x128xbf16>, vector<128x128xbf16>, vector<256x128xf32> -> vector<256x128xf32>
    %23 = arith.addf %17, %22 : vector<256x128xf32>
    %24 = vector.extract_strided_slice %0 {offsets = [4, 0, 0], sizes = [16, 16, 128], strides = [1, 1, 1]} : vector<20x16x128xbf16> to vector<16x16x128xbf16>
    %25 = vector.shape_cast %24 : vector<16x16x128xbf16> to vector<256x128xbf16>
    %c4 = arith.constant 4 : index
    %c0_14 = arith.constant 0 : index
    %c0_15 = arith.constant 0 : index
    %26 = vector.load %arg2[%c4, %c0_14, %c0_15] : memref<5x128x128xbf16, #tpu.memory_space<vmem>>, vector<1x128x128xbf16>
    %27 = vector.shape_cast %26 : vector<1x128x128xbf16> to vector<128x128xbf16>
    %cst_16 = arith.constant dense<0.000000e+00> : vector<256x128xf32>
    %28 = tpu.matmul %25, %27, %cst_16 {dimension_numbers = #tpu.dot_dimension_numbers<[1], [0], [0], [1], [0, 0, 1, 1], [], []>} : vector<256x128xbf16>, vector<128x128xbf16>, vector<256x128xf32> -> vector<256x128xf32>
    %29 = arith.addf %23, %28 : vector<256x128xf32>
    %30 = vector.shape_cast %29 : vector<256x128xf32> to vector<16x16x128xf32>
    %c0_17 = arith.constant 0 : index
    %c0_18 = arith.constant 0 : index
    %31 = vector.load %arg3[%c0_17, %c0_18] : memref<1x128xf32, #tpu.memory_space<vmem>>, vector<1x128xf32>
    %32 = vector.shape_cast %31 : vector<1x128xf32> to vector<1x1x128xf32>
    %33 = vector.broadcast %32 : vector<1x1x128xf32> to vector<16x16x128xf32>
    %34 = arith.addf %30, %33 : vector<16x16x128xf32>
    %cst_19 = arith.constant 0.000000e+00 : f32
    %35 = vector.broadcast %cst_19 : f32 to vector<16x16x128xf32>
    %36 = arith.maximumf %34, %35 : vector<16x16x128xf32>
    %37 = tpu.iota {dimensions = array<i32: 0>} : vector<16x16x128xi32>
    %38 = tpu.iota {dimensions = array<i32: 2>} : vector<16x16x128xi32>
    %c0_i32 = arith.constant 0 : i32
    %39 = vector.broadcast %c0_i32 : i32 to vector<16x16x128xi32>
    %c0_i32_20 = arith.constant 0 : i32
    %40 = vector.broadcast %c0_i32_20 : i32 to vector<16x16x128xi32>
    %41 = arith.cmpi sge, %38, %40 : vector<16x16x128xi32>
    %c8_i32 = arith.constant 8 : i32
    %42 = vector.broadcast %c8_i32 : i32 to vector<16x16x128xi32>
    %43 = arith.cmpi slt, %38, %42 : vector<16x16x128xi32>
    %44 = arith.andi %41, %43 : vector<16x16x128xi1>
    %c14_i32 = arith.constant 14 : i32
    %45 = vector.broadcast %c14_i32 : i32 to vector<16x16x128xi32>
    %46 = arith.select %44, %45, %39 : vector<16x16x128xi1>, vector<16x16x128xi32>
    %c8_i32_21 = arith.constant 8 : i32
    %47 = vector.broadcast %c8_i32_21 : i32 to vector<16x16x128xi32>
    %48 = arith.cmpi sge, %38, %47 : vector<16x16x128xi32>
    %c16_i32 = arith.constant 16 : i32
    %49 = vector.broadcast %c16_i32 : i32 to vector<16x16x128xi32>
    %50 = arith.cmpi slt, %38, %49 : vector<16x16x128xi32>
    %51 = arith.andi %48, %50 : vector<16x16x128xi1>
    %c13_i32 = arith.constant 13 : i32
    %52 = vector.broadcast %c13_i32 : i32 to vector<16x16x128xi32>
    %53 = arith.select %51, %52, %46 : vector<16x16x128xi1>, vector<16x16x128xi32>
    %c16_i32_22 = arith.constant 16 : i32
    %54 = vector.broadcast %c16_i32_22 : i32 to vector<16x16x128xi32>
    %55 = arith.cmpi sge, %38, %54 : vector<16x16x128xi32>
    %c24_i32 = arith.constant 24 : i32
    %56 = vector.broadcast %c24_i32 : i32 to vector<16x16x128xi32>
    %57 = arith.cmpi slt, %38, %56 : vector<16x16x128xi32>
    %58 = arith.andi %55, %57 : vector<16x16x128xi1>
    %c12_i32 = arith.constant 12 : i32
    %59 = vector.broadcast %c12_i32 : i32 to vector<16x16x128xi32>
    %60 = arith.select %58, %59, %53 : vector<16x16x128xi1>, vector<16x16x128xi32>
    %61 = arith.cmpi slt, %37, %60 : vector<16x16x128xi32>
    %cst_23 = arith.constant 0.000000e+00 : f32
    %62 = vector.broadcast %cst_23 : f32 to vector<16x16x128xf32>
    %63 = arith.select %61, %36, %62 : vector<16x16x128xi1>, vector<16x16x128xf32>
    %cst_24 = arith.constant dense<0xFF800000> : vector<16x128xf32>
    %64 = vector.multi_reduction <maximumf>, %63, %cst_24 [0] : vector<16x16x128xf32> to vector<16x128xf32>
    %c0_25 = arith.constant 0 : index
    %c0_26 = arith.constant 0 : index
    %65 = vector.load %arg4[%c0_25, %c0_26] : memref<128x128xf32, #tpu.memory_space<vmem>>, vector<128x128xf32>
    %cst_27 = arith.constant dense<0.000000e+00> : vector<16x128xf32>
    %66 = tpu.matmul %64, %65, %cst_27 {dimension_numbers = #tpu.dot_dimension_numbers<[1], [0], [0], [1], [0, 0, 1, 1], [], []>} : vector<16x128xf32>, vector<128x128xf32>, vector<16x128xf32> -> vector<16x128xf32>
    %c0_28 = arith.constant 0 : index
    %c0_29 = arith.constant 0 : index
    %67 = vector.load %arg5[%c0_28, %c0_29] : memref<1x128xf32, #tpu.memory_space<vmem>>, vector<1x128xf32>
    %68 = vector.broadcast %67 : vector<1x128xf32> to vector<16x128xf32>
    %69 = arith.addf %66, %68 : vector<16x128xf32>
    %c0_30 = arith.constant 0 : index
    %c0_31 = arith.constant 0 : index
    %70 = vector.load %arg6[%c0_30, %c0_31] : memref<16x128xf32, #tpu.memory_space<vmem>>, vector<16x128xf32>
    tpu.vector_store %arg6[%c0_30, %c0_31], %69 {strides = array<i32>} : memref<16x128xf32, #tpu.memory_space<vmem>>, vector<16x128xf32>,
    return
  }
  func.func @transform_0(%arg0: i32) -> (i32, i32, i32) {
    %c0_i32 = arith.constant 0 : i32
    %c0_i32_0 = arith.constant 0 : i32
    %c0_i32_1 = arith.constant 0 : i32
    return %c0_i32, %arg0, %c0_i32_0 : i32, i32, i32
  }
  func.func @transform_1(%arg0: i32) -> (i32, i32, i32) {
    %c0_i32 = arith.constant 0 : i32
    %c0_i32_0 = arith.constant 0 : i32
    %c0_i32_1 = arith.constant 0 : i32
    %c0_i32_2 = arith.constant 0 : i32
    return %c0_i32, %c0_i32_0, %c0_i32_1 : i32, i32, i32
  }
  func.func @transform_2(%arg0: i32) -> (i32, i32) {
    %c0_i32 = arith.constant 0 : i32
    %c0_i32_0 = arith.constant 0 : i32
    %c0_i32_1 = arith.constant 0 : i32
    return %c0_i32, %c0_i32_0 : i32, i32
  }
  func.func @transform_3(%arg0: i32) -> (i32, i32) {
    %c0_i32 = arith.constant 0 : i32
    %c0_i32_0 = arith.constant 0 : i32
    %c0_i32_1 = arith.constant 0 : i32
    return %c0_i32, %c0_i32_0 : i32, i32
  }
  func.func @transform_4(%arg0: i32) -> (i32, i32) {
    %c0_i32 = arith.constant 0 : i32
    %c0_i32_0 = arith.constant 0 : i32
    %c0_i32_1 = arith.constant 0 : i32
    return %c0_i32, %c0_i32_0 : i32, i32
  }
  func.func @transform_5(%arg0: i32) -> (i32, i32) {
    %c0_i32 = arith.constant 0 : i32
    %c0_i32_0 = arith.constant 0 : i32
    return %arg0, %c0_i32 : i32, i32
  }
}

</mosaic_0001>

<llo_original>
// kernel: cnn_text_forward.1
$region0: #{cnn_text_forward.1}
  #allocation0 [shape = 'u32[]', space=smem, size = 0x4, offset = 0x4, fixed_abs, tag = 'smem constant byte address 0x4 - core index']
  #allocation1 [shape = 'u32[144,128]{1,0:T(1,128)}', space=vmem, size = 0x12000, scoped, tag = 'internal scratch']
  %s0 = inlined_call_operand.vmem [shape: bf16[20,16,128], index: 0, kind: input, shape index: {}]
  %s1 = inlined_call_operand.vmem [shape: bf16[5,128,128], index: 1, kind: input, shape index: {}]
  %s2 = inlined_call_operand.vmem [shape: f32[1,128], index: 2, kind: input, shape index: {}]
  %s3 = inlined_call_operand.vmem [shape: f32[128,128], index: 3, kind: input, shape index: {}]
  %s4 = inlined_call_operand.vmem [shape: f32[1,128], index: 4, kind: input, shape index: {}]
  %s5 = inlined_call_operand.vmem [shape: f32[16,128], index: 5, kind: output, shape index: {}]
  %s6 = sld [smem:[#allocation0]]
  $region30: #{cnn_text_forward.1} parent=0
    _
  %s8 = ssub.s32 1, %s6
  %s9 = scalar_select 0, %s8, %s6
  // Predicated region
  $region2: #{cnn_text_forward.1} parent=0 // pred_check
    _
  $region3: #{cnn_text_forward.1} parent=0 // pred_check_branch
    %11 = sbr.rel (0) target = $region5
  $region4: #{cnn_text_forward.1} parent=0 // pred_region
    _
  $region5: #{cnn_text_forward.1} parent=0 // pred_fallthru
    _
  // Predicated region
  $region6: #{cnn_text_forward.1} parent=0 // pred_check
    _
  $region7: #{cnn_text_forward.1} parent=0 // pred_check_branch
    %13 = sbr.rel (0) target = $region9
  $region8: #{cnn_text_forward.1} parent=0 // pred_region
    _
  $region9: #{cnn_text_forward.1} parent=0 // pred_fallthru
    _
  // Predicated region
  $region10: #{cnn_text_forward.1} parent=0 // pred_check
    _
  $region11: #{cnn_text_forward.1} parent=0 // pred_check_branch
    %15 = sbr.rel (0) target = $region13
  $region12: #{cnn_text_forward.1} parent=0 // pred_region
    _
  $region13: #{cnn_text_forward.1} parent=0 // pred_fallthru
    _
  // Predicated region
  $region14: #{cnn_text_forward.1} parent=0 // pred_check
    _
  $region15: #{cnn_text_forward.1} parent=0 // pred_check_branch
    %17 = sbr.rel (0) target = $region17
  $region16: #{cnn_text_forward.1} parent=0 // pred_region
    _
  $region17: #{cnn_text_forward.1} parent=0 // pred_fallthru
    _
  // Predicated region
  $region18: #{cnn_text_forward.1} parent=0 // pred_check
    _
  $region19: #{cnn_text_forward.1} parent=0 // pred_check_branch
    %19 = sbr.rel (0) target = $region21
  $region20: #{cnn_text_forward.1} parent=0 // pred_region
    _
  $region21: #{cnn_text_forward.1} parent=0 // pred_fallthru
    _
  %v21 = vld [vmem:[%s0] sm:$0xf]
  %v22 = vld [vmem:[%s0 + $0x4] sm:$0xf]
  %v23 = vld [vmem:[%s0 + $0x8] sm:$0xf]
  %v24 = vld [vmem:[%s0 + $0xc] sm:$0xf]
  %v25 = vld [vmem:[%s0 + $0x10] sm:$0xf]
  %v26 = vld [vmem:[%s0 + $0x14] sm:$0xf]
  %v27 = vld [vmem:[%s0 + $0x18] sm:$0xf]
  %v28 = vld [vmem:[%s0 + $0x1c] sm:$0xf]
  %v29 = vld [vmem:[%s0 + $0x20] sm:$0xf]
  %v30 = vld [vmem:[%s0 + $0x24] sm:$0xf]
  %v31 = vld [vmem:[%s0 + $0x28] sm:$0xf]
  %v32 = vld [vmem:[%s0 + $0x2c] sm:$0xf]
  %v33 = vld [vmem:[%s0 + $0x30] sm:$0xf]
  %v34 = vld [vmem:[%s0 + $0x34] sm:$0xf]
  %v35 = vld [vmem:[%s0 + $0x38] sm:$0xf]
  %v36 = vld [vmem:[%s0 + $0x3c] sm:$0xf]
  %v37 = vld [vmem:[%s0 + $0x40] sm:$0xf]
  %v38 = vld [vmem:[%s0 + $0x44] sm:$0xf]
  %v39 = vld [vmem:[%s0 + $0x48] sm:$0xf]
  %v40 = vld [vmem:[%s0 + $0x4c] sm:$0xf]
  %v41 = vld [vmem:[%s0 + $0x50] sm:$0xf]
  %v42 = vld [vmem:[%s0 + $0x54] sm:$0xf]
  %v43 = vld [vmem:[%s0 + $0x58] sm:$0xf]
  %v44 = vld [vmem:[%s0 + $0x5c] sm:$0xf]
  %v45 = vld [vmem:[%s0 + $0x60] sm:$0xf]
  %v46 = vld [vmem:[%s0 + $0x64] sm:$0xf]
  %v47 = vld [vmem:[%s0 + $0x68] sm:$0xf]
  %v48 = vld [vmem:[%s0 + $0x6c] sm:$0xf]
  %v49 = vld [vmem:[%s0 + $0x70] sm:$0xf]
  %v50 = vld [vmem:[%s0 + $0x74] sm:$0xf]
  %v51 = vld [vmem:[%s0 + $0x78] sm:$0xf]
  %v52 = vld [vmem:[%s0 + $0x7c] sm:$0xf]
  %v53 = vld [vmem:[%s0 + $0x80] sm:$0xf]
  %v54 = vld [vmem:[%s0 + $0x84] sm:$0xf]
  %v55 = vld [vmem:[%s0 + $0x88] sm:$0xf]
  %v56 = vld [vmem:[%s0 + $0x8c] sm:$0xf]
  %v57 = vld [vmem:[%s0 + $0x90] sm:$0xf]
  %v58 = vld [vmem:[%s0 + $0x94] sm:$0xf]
  %v59 = vld [vmem:[%s0 + $0x98] sm:$0xf]
  %v60 = vld [vmem:[%s0 + $0x9c] sm:$0xf]
  %v61 = vld [vmem:[%s1] sm:$0xf]
  %v62 = vld [vmem:[%s1 + $0x4] sm:$0xf]
  %v63 = vld [vmem:[%s1 + $0x8] sm:$0xf]
  %v64 = vld [vmem:[%s1 + $0xc] sm:$0xf]
  %v65 = vld [vmem:[%s1 + $0x10] sm:$0xf]
  %v66 = vld [vmem:[%s1 + $0x14] sm:$0xf]
  %v67 = vld [vmem:[%s1 + $0x18] sm:$0xf]
  %v68 = vld [vmem:[%s1 + $0x1c] sm:$0xf]
  %v69 = vld [vmem:[%s1 + $0x20] sm:$0xf]
  %v70 = vld [vmem:[%s1 + $0x24] sm:$0xf]
  %v71 = vld [vmem:[%s1 + $0x28] sm:$0xf]
  %v72 = vld [vmem:[%s1 + $0x2c] sm:$0xf]
  %v73 = vld [vmem:[%s1 + $0x30] sm:$0xf]
  %v74 = vld [vmem:[%s1 + $0x34] sm:$0xf]
  %v75 = vld [vmem:[%s1 + $0x38] sm:$0xf]
  %v76 = vld [vmem:[%s1 + $0x3c] sm:$0xf]
  %s77 = scalar_lea.vmem %s1, 64
  %v78 = vld [vmem:[%s77] sm:$0xf]
  %v79 = vld [vmem:[%s77 + $0x4] sm:$0xf]
  %v80 = vld [vmem:[%s77 + $0x8] sm:$0xf]
  %v81 = vld [vmem:[%s77 + $0xc] sm:$0xf]
  %v82 = vld [vmem:[%s77 + $0x10] sm:$0xf]
  %v83 = vld [vmem:[%s77 + $0x14] sm:$0xf]
  %v84 = vld [vmem:[%s77 + $0x18] sm:$0xf]
  %v85 = vld [vmem:[%s77 + $0x1c] sm:$0xf]
  %v86 = vld [vmem:[%s77 + $0x20] sm:$0xf]
  %v87 = vld [vmem:[%s77 + $0x24] sm:$0xf]
  %v88 = vld [vmem:[%s77 + $0x28] sm:$0xf]
  %v89 = vld [vmem:[%s77 + $0x2c] sm:$0xf]
  %v90 = vld [vmem:[%s77 + $0x30] sm:$0xf]
  %v91 = vld [vmem:[%s77 + $0x34] sm:$0xf]
  %v92 = vld [vmem:[%s77 + $0x38] sm:$0xf]
  %v93 = vld [vmem:[%s77 + $0x3c] sm:$0xf]
  %v126 = vunpack.c.l.b16 %v23
  %v127 = vunpack.c.l.b16 %v24
  %v128 = vunpack.c.l.b16 %v25
  %v129 = vunpack.c.l.b16 %v26
  %v130 = vunpack.c.l.b16 %v27
  %v131 = vunpack.c.l.b16 %v28
  %v132 = vunpack.c.l.b16 %v29
  %v133 = vunpack.c.l.b16 %v30
  %v134 = vunpack.c.l.b16 %v31
  %v135 = vunpack.c.l.b16 %v32
  %v136 = vunpack.c.l.b16 %v33
  %v137 = vunpack.c.l.b16 %v34
  %v138 = vunpack.c.l.b16 %v35
  %v139 = vunpack.c.l.b16 %v36
  %v140 = vunpack.c.l.b16 %v37
  %v141 = vunpack.c.l.b16 %v38
  %v142 = vunpack.c.l.b16 %v39
  %v143 = vunpack.c.l.b16 %v40
  %v144 = vunpack.c.l.b16 %v41
  %v145 = vunpack.c.l.b16 %v42
  %v146 = vunpack.c.l.b16 %v43
  %v147 = vunpack.c.l.b16 %v44
  %v148 = vunpack.c.l.b16 %v45
  %v149 = vunpack.c.l.b16 %v46
  %v150 = vunpack.c.l.b16 %v47
  %v151 = vunpack.c.l.b16 %v48
  %v152 = vunpack.c.l.b16 %v49
  %v153 = vunpack.c.l.b16 %v50
  %v154 = vunpack.c.l.b16 %v51
  %v155 = vunpack.c.l.b16 %v52
  %v156 = vunpack.c.l.b16 %v53
  %v157 = vunpack.c.l.b16 %v54
  %v158 = vpack.c.b16 %v127, %v126
  %v159 = vpack.c.b16 %v129, %v128
  %v160 = vpack.c.b16 %v131, %v130
  %v161 = vpack.c.b16 %v133, %v132
  %v162 = vpack.c.b16 %v135, %v134
  %v163 = vpack.c.b16 %v137, %v136
  %v164 = vpack.c.b16 %v139, %v138
  %v165 = vpack.c.b16 %v141, %v140
  %v166 = vpack.c.b16 %v143, %v142
  %v167 = vpack.c.b16 %v145, %v144
  %v168 = vpack.c.b16 %v147, %v146
  %v169 = vpack.c.b16 %v149, %v148
  %v170 = vpack.c.b16 %v151, %v150
  %v171 = vpack.c.b16 %v153, %v152
  %v172 = vpack.c.b16 %v155, %v154
  %v173 = vpack.c.b16 %v157, %v156
  %v206 = vunpack.c.l.b16 %v78
  %v207 = vunpack.c.l.b16 %v79
  %v208 = vunpack.c.l.b16 %v80
  %v209 = vunpack.c.l.b16 %v81
  %v210 = vunpack.c.l.b16 %v82
  %v211 = vunpack.c.l.b16 %v83
  %v212 = vunpack.c.l.b16 %v84
  %v213 = vunpack.c.l.b16 %v85
  %v214 = vunpack.c.l.b16 %v86
  %v215 = vunpack.c.l.b16 %v87
  %v216 = vunpack.c.l.b16 %v88
  %v217 = vunpack.c.l.b16 %v89
  %v218 = vunpack.c.l.b16 %v90
  %v219 = vunpack.c.l.b16 %v91
  %v220 = vunpack.c.l.b16 %v92
  %v221 = vunpack.c.l.b16 %v93
  %v222 = vpack.c.b16 %v207, %v206
  %v223 = vpack.c.b16 %v209, %v208
  %v224 = vpack.c.b16 %v211, %v210
  %v225 = vpack.c.b16 %v213, %v212
  %v226 = vpack.c.b16 %v215, %v214
  %v227 = vpack.c.b16 %v217, %v216
  %v228 = vpack.c.b16 %v219, %v218
  %v229 = vpack.c.b16 %v221, %v220
  %238 = vmatprep.subr.bf16.mxu0 0
  %239 = vmatpush1.bf16.msra.mxu0 %v222
  %240 = vmatprep.subr.bf16.mxu0 0
  %241 = vmatpush1.bf16.msra.mxu0 %v223
  %242 = vmatprep.subr.bf16.mxu0 0
  %243 = vmatpush1.bf16.msra.mxu0 %v224
  %244 = vmatprep.subr.bf16.mxu0 0
  %245 = vmatpush1.bf16.msra.mxu0 %v225
  %246 = vmatprep.subr.bf16.mxu0 0
  %247 = vmatpush1.bf16.msra.mxu0 %v226
  %248 = vmatprep.subr.bf16.mxu0 0
  %249 = vmatpush1.bf16.msra.mxu0 %v227
  %250 = vmatprep.subr.bf16.mxu0 0
  %251 = vmatpush1.bf16.msra.mxu0 %v228
  %252 = vmatprep.subr.bf16.mxu0 0
  %253 = vmatpush1.bf16.msra.mxu0 %v229
  %254 = vmatprep.subr.bf16.mxu0 0
  %255 = vmatpush1.bf16.msra.mxu0 0
  %256 = vmatprep.subr.bf16.mxu0 0
  %257 = vmatpush1.bf16.msra.mxu0 0
  %258 = vmatprep.subr.bf16.mxu0 0
  %259 = vmatpush1.bf16.msra.mxu0 0
  %260 = vmatprep.subr.bf16.mxu0 0
  %261 = vmatpush1.bf16.msra.mxu0 0
  %262 = vmatprep.subr.bf16.mxu0 0
  %263 = vmatpush1.bf16.msra.mxu0 0
  %264 = vmatprep.subr.bf16.mxu0 0
  %265 = vmatpush1.bf16.msra.mxu0 0
  %266 = vmatprep.subr.bf16.mxu0 0
  %267 = vmatpush1.bf16.msra.mxu0 0
  %268 = vmatprep.subr.bf16.mxu0 0
  %269 = vmatpush1.bf16.msra.mxu0 0
  %270 = vmatprep.mubr.bf16.mxu0 0
  %271 = vmatmul.mubr.bf16.gmra.mrb[0].mxu0 %v158
  %v272 = vpop.f32.mrb[0].mxu0
  %v273 = vadd.f32 0.0, %v272
  %v274 = vpop.f32.mrb[0].mxu0
  %v275 = vpop.f32.mrb[0].mxu0
  %v276 = vadd.f32 0.0, %v275
  %v277 = vpop.f32.mrb[0].mxu0
  %278 = vmatprep.mubr.bf16.mxu0 0
  %279 = vmatmul.mubr.bf16.gmra.mrb[0].mxu0 %v159
  %v280 = vpop.f32.mrb[0].mxu0
  %v281 = vadd.f32 0.0, %v280
  %v282 = vpop.f32.mrb[0].mxu0
  %v283 = vpop.f32.mrb[0].mxu0
  %v284 = vadd.f32 0.0, %v283
  %v285 = vpop.f32.mrb[0].mxu0
  %286 = vmatprep.mubr.bf16.mxu0 0
  %287 = vmatmul.mubr.bf16.gmra.mrb[0].mxu0 %v160
  %v288 = vpop.f32.mrb[0].mxu0
  %v289 = vadd.f32 0.0, %v288
  %v290 = vpop.f32.mrb[0].mxu0
  %v291 = vpop.f32.mrb[0].mxu0
  %v292 = vadd.f32 0.0, %v291
  %v293 = vpop.f32.mrb[0].mxu0
  %294 = vmatprep.mubr.bf16.mxu0 0
  %295 = vmatmul.mubr.bf16.gmra.mrb[0].mxu0 %v161
  %v296 = vpop.f32.mrb[0].mxu0
  %v297 = vadd.f32 0.0, %v296
  %v298 = vpop.f32.mrb[0].mxu0
  %v299 = vpop.f32.mrb[0].mxu0
  %v300 = vadd.f32 0.0, %v299
  %v301 = vpop.f32.mrb[0].mxu0
  %302 = vmatprep.mubr.bf16.mxu0 0
  %303 = vmatmul.mubr.bf16.gmra.mrb[0].mxu0 %v162
  %v304 = vpop.f32.mrb[0].mxu0
  %v305 = vadd.f32 0.0, %v304
  %v306 = vpop.f32.mrb[0].mxu0
  %v307 = vpop.f32.mrb[0].mxu0
  %v308 = vadd.f32 0.0, %v307
  %v309 = vpop.f32.mrb[0].mxu0
  %310 = vmatprep.mubr.bf16.mxu0 0
  %311 = vmatmul.mubr.bf16.gmra.mrb[0].mxu0 %v163
  %v312 = vpop.f32.mrb[0].mxu0
  %v313 = vadd.f32 0.0, %v312
  %v314 = vpop.f32.mrb[0].mxu0
  %v315 = vpop.f32.mrb[0].mxu0
  %v316 = vadd.f32 0.0, %v315
  %v317 = vpop.f32.mrb[0].mxu0
  %318 = vmatprep.mubr.bf16.mxu0 0
  %319 = vmatmul.mubr.bf16.gmra.mrb[0].mxu0 %v164
  %v320 = vpop.f32.mrb[0].mxu0
  %v321 = vadd.f32 0.0, %v320
  %v322 = vpop.f32.mrb[0].mxu0
  %v323 = vpop.f32.mrb[0].mxu0
  %v324 = vadd.f32 0.0, %v323
  %v325 = vpop.f32.mrb[0].mxu0
  %326 = vmatprep.mubr.bf16.mxu0 0
  %327 = vmatmul.mubr.bf16.gmra.mrb[0].mxu0 %v165
  %v328 = vpop.f32.mrb[0].mxu0
  %v329 = vadd.f32 0.0, %v328
  %v330 = vpop.f32.mrb[0].mxu0
  %v331 = vpop.f32.mrb[0].mxu0
  %v332 = vadd.f32 0.0, %v331
  %v333 = vpop.f32.mrb[0].mxu0
  %334 = vmatprep.mubr.bf16.mxu0 0
  %335 = vmatmul.mubr.bf16.gmra.mrb[0].mxu0 %v166
  %v336 = vpop.f32.mrb[0].mxu0
  %v337 = vadd.f32 0.0, %v336
  %v338 = vpop.f32.mrb[0].mxu0
  %v339 = vpop.f32.mrb[0].mxu0
  %v340 = vadd.f32 0.0, %v339
  %v341 = vpop.f32.mrb[0].mxu0
  %342 = vmatprep.mubr.bf16.mxu0 0
  %343 = vmatmul.mubr.bf16.gmra.mrb[0].mxu0 %v167
  %v344 = vpop.f32.mrb[0].mxu0
  %v345 = vadd.f32 0.0, %v344
  %v346 = vpop.f32.mrb[0].mxu0
  %v347 = vpop.f32.mrb[0].mxu0
  %v348 = vadd.f32 0.0, %v347
  %v349 = vpop.f32.mrb[0].mxu0
  %350 = vmatprep.mubr.bf16.mxu0 0
  %351 = vmatmul.mubr.bf16.gmra.mrb[0].mxu0 %v168
  %v352 = vpop.f32.mrb[0].mxu0
  %v353 = vadd.f32 0.0, %v352
  %v354 = vpop.f32.mrb[0].mxu0
  %v355 = vpop.f32.mrb[0].mxu0
  %v356 = vadd.f32 0.0, %v355
  %v357 = vpop.f32.mrb[0].mxu0
  %358 = vmatprep.mubr.bf16.mxu0 0
  %359 = vmatmul.mubr.bf16.gmra.mrb[0].mxu0 %v169
  %v360 = vpop.f32.mrb[0].mxu0
  %v361 = vadd.f32 0.0, %v360
  %v362 = vpop.f32.mrb[0].mxu0
  %v363 = vpop.f32.mrb[0].mxu0
  %v364 = vadd.f32 0.0, %v363
  %v365 = vpop.f32.mrb[0].mxu0
  %366 = vmatprep.mubr.bf16.mxu0 0
  %367 = vmatmul.mubr.bf16.gmra.mrb[0].mxu0 %v170
  %v368 = vpop.f32.mrb[0].mxu0
  %v369 = vadd.f32 0.0, %v368
  %v370 = vpop.f32.mrb[0].mxu0
  %v371 = vpop.f32.mrb[0].mxu0
  %v372 = vadd.f32 0.0, %v371
  %v373 = vpop.f32.mrb[0].mxu0
  %374 = vmatprep.mubr.bf16.mxu0 0
  %375 = vmatmul.mubr.bf16.gmra.mrb[0].mxu0 %v171
  %v376 = vpop.f32.mrb[0].mxu0
  %v377 = vadd.f32 0.0, %v376
  %v378 = vpop.f32.mrb[0].mxu0
  %v379 = vpop.f32.mrb[0].mxu0
  %v380 = vadd.f32 0.0, %v379
  %v381 = vpop.f32.mrb[0].mxu0
  %382 = vmatprep.mubr.bf16.mxu0 0
  %383 = vmatmul.mubr.bf16.gmra.mrb[0].mxu0 %v172
  %v384 = vpop.f32.mrb[0].mxu0
  %v385 = vadd.f32 0.0, %v384
  %v386 = vpop.f32.mrb[0].mxu0
  %v387 = vpop.f32.mrb[0].mxu0
  %v388 = vadd.f32 0.0, %v387
  %v389 = vpop.f32.mrb[0].mxu0
  %390 = vmatprep.mubr.bf16.mxu0 0
  %391 = vmatmul.mubr.bf16.gmra.mrb[0].mxu0 %v173
  %v392 = vpop.f32.mrb[0].mxu0
  %v393 = vadd.f32 0.0, %v392
  %v394 = vpop.f32.mrb[0].mxu0
  %v395 = vpop.f32.mrb[0].mxu0
  %v396 = vadd.f32 0.0, %v395
  %v397 = vpop.f32.mrb[0].mxu0
  %398 = vdwg.mxu0
  %v401 = vunpack.c.l.b16 %v21
  %v402 = vunpack.c.l.b16 %v22
  %v403 = vpack.c.b16 %v402, %v401
  %v421 = vunpack.c.l.b16 %v61
  %v422 = vunpack.c.l.b16 %v62
  %v423 = vunpack.c.l.b16 %v63
  %v424 = vunpack.c.l.b16 %v64
  %v425 = vunpack.c.l.b16 %v65
  %v426 = vunpack.c.l.b16 %v66
  %v427 = vunpack.c.l.b16 %v67
  %v428 = vunpack.c.l.b16 %v68
  %v429 = vunpack.c.l.b16 %v69
  %v430 = vunpack.c.l.b16 %v70
  %v431 = vunpack.c.l.b16 %v71
  %v432 = vunpack.c.l.b16 %v72
  %v433 = vunpack.c.l.b16 %v73
  %v434 = vunpack.c.l.b16 %v74
  %v435 = vunpack.c.l.b16 %v75
  %v436 = vunpack.c.l.b16 %v76
  %v437 = vpack.c.b16 %v422, %v421
  %v438 = vpack.c.b16 %v424, %v423
  %v439 = vpack.c.b16 %v426, %v425
  %v440 = vpack.c.b16 %v428, %v427
  %v441 = vpack.c.b16 %v430, %v429
  %v442 = vpack.c.b16 %v432, %v431
  %v443 = vpack.c.b16 %v434, %v433
  %v444 = vpack.c.b16 %v436, %v435
  %453 = vmatprep.subr.bf16.mxu0 0
  %454 = vmatpush1.bf16.msra.mxu0 %v437
  %455 = vmatprep.subr.bf16.mxu0 0
  %456 = vmatpush1.bf16.msra.mxu0 %v438
  %457 = vmatprep.subr.bf16.mxu0 0
  %458 = vmatpush1.bf16.msra.mxu0 %v439
  %459 = vmatprep.subr.bf16.mxu0 0
  %460 = vmatpush1.bf16.msra.mxu0 %v440
  %461 = vmatprep.subr.bf16.mxu0 0
  %462 = vmatpush1.bf16.msra.mxu0 %v441
  %463 = vmatprep.subr.bf16.mxu0 0
  %464 = vmatpush1.bf16.msra.mxu0 %v442
  %465 = vmatprep.subr.bf16.mxu0 0
  %466 = vmatpush1.bf16.msra.mxu0 %v443
  %467 = vmatprep.subr.bf16.mxu0 0
  %468 = vmatpush1.bf16.msra.mxu0 %v444
  %469 = vmatprep.subr.bf16.mxu0 0
  %470 = vmatpush1.bf16.msra.mxu0 0
  %471 = vmatprep.subr.bf16.mxu0 0
  %472 = vmatpush1.bf16.msra.mxu0 0
  %473 = vmatprep.subr.bf16.mxu0 0
  %474 = vmatpush1.bf16.msra.mxu0 0
  %475 = vmatprep.subr.bf16.mxu0 0
  %476 = vmatpush1.bf16.msra.mxu0 0
  %477 = vmatprep.subr.bf16.mxu0 0
  %478 = vmatpush1.bf16.msra.mxu0 0
  %479 = vmatprep.subr.bf16.mxu0 0
  %480 = vmatpush1.bf16.msra.mxu0 0
  %481 = vmatprep.subr.bf16.mxu0 0
  %482 = vmatpush1.bf16.msra.mxu0 0
  %483 = vmatprep.subr.bf16.mxu0 0
  %484 = vmatpush1.bf16.msra.mxu0 0
  %485 = vmatprep.mubr.bf16.mxu0 0
  %486 = vmatmul.mubr.bf16.gmra.mrb[0].mxu0 %v403
  %v487 = vpop.f32.mrb[0].mxu0
  %v488 = vadd.f32 %v273, %v487
  %v489 = vpop.f32.mrb[0].mxu0
  %v490 = vpop.f32.mrb[0].mxu0
  %v491 = vadd.f32 %v276, %v490
  %v492 = vpop.f32.mrb[0].mxu0
  %493 = vmatprep.mubr.bf16.mxu0 0
  %494 = vmatmul.mubr.bf16.gmra.mrb[0].mxu0 %v158
  %v495 = vpop.f32.mrb[0].mxu0
  %v496 = vadd.f32 %v281, %v495
  %v497 = vpop.f32.mrb[0].mxu0
  %v498 = vpop.f32.mrb[0].mxu0
  %v499 = vadd.f32 %v284, %v498
  %v500 = vpop.f32.mrb[0].mxu0
  %501 = vmatprep.mubr.bf16.mxu0 0
  %502 = vmatmul.mubr.bf16.gmra.mrb[0].mxu0 %v159
  %v503 = vpop.f32.mrb[0].mxu0
  %v504 = vadd.f32 %v289, %v503
  %v505 = vpop.f32.mrb[0].mxu0
  %v506 = vpop.f32.mrb[0].mxu0
  %v507 = vadd.f32 %v292, %v506
  %v508 = vpop.f32.mrb[0].mxu0
  %509 = vmatprep.mubr.bf16.mxu0 0
  %510 = vmatmul.mubr.bf16.gmra.mrb[0].mxu0 %v160
  %v511 = vpop.f32.mrb[0].mxu0
  %v512 = vadd.f32 %v297, %v511
  %v513 = vpop.f32.mrb[0].mxu0
  %v514 = vpop.f32.mrb[0].mxu0
  %v515 = vadd.f32 %v300, %v514
  %v516 = vpop.f32.mrb[0].mxu0
  %517 = vmatprep.mubr.bf16.mxu0 0
  %518 = vmatmul.mubr.bf16.gmra.mrb[0].mxu0 %v161
  %v519 = vpop.f32.mrb[0].mxu0
  %v520 = vadd.f32 %v305, %v519
  %v521 = vpop.f32.mrb[0].mxu0
  %v522 = vpop.f32.mrb[0].mxu0
  %v523 = vadd.f32 %v308, %v522
  %v524 = vpop.f32.mrb[0].mxu0
  %525 = vmatprep.mubr.bf16.mxu0 0
  %526 = vmatmul.mubr.bf16.gmra.mrb[0].mxu0 %v162
  %v527 = vpop.f32.mrb[0].mxu0
  %v528 = vadd.f32 %v313, %v527
  %v529 = vpop.f32.mrb[0].mxu0
  %v530 = vpop.f32.mrb[0].mxu0
  %v531 = vadd.f32 %v316, %v530
  %v532 = vpop.f32.mrb[0].mxu0
  %533 = vmatprep.mubr.bf16.mxu0 0
  %534 = vmatmul.mubr.bf16.gmra.mrb[0].mxu0 %v163
  %v535 = vpop.f32.mrb[0].mxu0
  %v536 = vadd.f32 %v321, %v535
  %v537 = vpop.f32.mrb[0].mxu0
  %v538 = vpop.f32.mrb[0].mxu0
  %v539 = vadd.f32 %v324, %v538
  %v540 = vpop.f32.mrb[0].mxu0
  %541 = vmatprep.mubr.bf16.mxu0 0
  %542 = vmatmul.mubr.bf16.gmra.mrb[0].mxu0 %v164
  %v543 = vpop.f32.mrb[0].mxu0
  %v544 = vadd.f32 %v329, %v543
  %v545 = vpop.f32.mrb[0].mxu0
  %v546 = vpop.f32.mrb[0].mxu0
  %v547 = vadd.f32 %v332, %v546
  %v548 = vpop.f32.mrb[0].mxu0
  %549 = vmatprep.mubr.bf16.mxu0 0
  %550 = vmatmul.mubr.bf16.gmra.mrb[0].mxu0 %v165
  %v551 = vpop.f32.mrb[0].mxu0
  %v552 = vadd.f32 %v337, %v551
  %v553 = vpop.f32.mrb[0].mxu0
  %v554 = vpop.f32.mrb[0].mxu0
  %v555 = vadd.f32 %v340, %v554
  %v556 = vpop.f32.mrb[0].mxu0
  %557 = vmatprep.mubr.bf16.mxu0 0
  %558 = vmatmul.mubr.bf16.gmra.mrb[0].mxu0 %v166
  %v559 = vpop.f32.mrb[0].mxu0
  %v560 = vadd.f32 %v345, %v559
  %v561 = vpop.f32.mrb[0].mxu0
  %v562 = vpop.f32.mrb[0].mxu0
  %v563 = vadd.f32 %v348, %v562
  %v564 = vpop.f32.mrb[0].mxu0
  %565 = vmatprep.mubr.bf16.mxu0 0
  %566 = vmatmul.mubr.bf16.gmra.mrb[0].mxu0 %v167
  %v567 = vpop.f32.mrb[0].mxu0
  %v568 = vadd.f32 %v353, %v567
  %v569 = vpop.f32.mrb[0].mxu0
  %v570 = vpop.f32.mrb[0].mxu0
  %v571 = vadd.f32 %v356, %v570
  %v572 = vpop.f32.mrb[0].mxu0
  %573 = vmatprep.mubr.bf16.mxu0 0
  %574 = vmatmul.mubr.bf16.gmra.mrb[0].mxu0 %v168
  %v575 = vpop.f32.mrb[0].mxu0
  %v576 = vadd.f32 %v361, %v575
  %v577 = vpop.f32.mrb[0].mxu0
  %v578 = vpop.f32.mrb[0].mxu0
  %v579 = vadd.f32 %v364, %v578
  %v580 = vpop.f32.mrb[0].mxu0
  %581 = vmatprep.mubr.bf16.mxu0 0
  %582 = vmatmul.mubr.bf16.gmra.mrb[0].mxu0 %v169
  %v583 = vpop.f32.mrb[0].mxu0
  %v584 = vadd.f32 %v369, %v583
  %v585 = vpop.f32.mrb[0].mxu0
  %v586 = vpop.f32.mrb[0].mxu0
  %v587 = vadd.f32 %v372, %v586
  %v588 = vpop.f32.mrb[0].mxu0
  %589 = vmatprep.mubr.bf16.mxu0 0
  %590 = vmatmul.mubr.bf16.gmra.mrb[0].mxu0 %v170
  %v591 = vpop.f32.mrb[0].mxu0
  %v592 = vadd.f32 %v377, %v591
  %v593 = vpop.f32.mrb[0].mxu0
  %v594 = vpop.f32.mrb[0].mxu0
  %v595 = vadd.f32 %v380, %v594
  %v596 = vpop.f32.mrb[0].mxu0
  %597 = vmatprep.mubr.bf16.mxu0 0
  %598 = vmatmul.mubr.bf16.gmra.mrb[0].mxu0 %v171
  %v599 = vpop.f32.mrb[0].mxu0
  %v600 = vadd.f32 %v385, %v599
  %v601 = vpop.f32.mrb[0].mxu0
  %v602 = vpop.f32.mrb[0].mxu0
  %v603 = vadd.f32 %v388, %v602
  %v604 = vpop.f32.mrb[0].mxu0
  %605 = vmatprep.mubr.bf16.mxu0 0
  %606 = vmatmul.mubr.bf16.gmra.mrb[0].mxu0 %v172
  %v607 = vpop.f32.mrb[0].mxu0
  %v608 = vadd.f32 %v393, %v607
  %v609 = vpop.f32.mrb[0].mxu0
  %v610 = vpop.f32.mrb[0].mxu0
  %v611 = vadd.f32 %v396, %v610
  %v612 = vpop.f32.mrb[0].mxu0
  %613 = vdwg.mxu0
  %s614 = scalar_lea.vmem %s1, 128
  %v615 = vld [vmem:[%s614] sm:$0xf]
  %v616 = vld [vmem:[%s614 + $0x4] sm:$0xf]
  %v617 = vld [vmem:[%s614 + $0x8] sm:$0xf]
  %v618 = vld [vmem:[%s614 + $0xc] sm:$0xf]
  %v619 = vld [vmem:[%s614 + $0x10] sm:$0xf]
  %v620 = vld [vmem:[%s614 + $0x14] sm:$0xf]
  %v621 = vld [vmem:[%s614 + $0x18] sm:$0xf]
  %v622 = vld [vmem:[%s614 + $0x1c] sm:$0xf]
  %v623 = vld [vmem:[%s614 + $0x20] sm:$0xf]
  %v624 = vld [vmem:[%s614 + $0x24] sm:$0xf]
  %v625 = vld [vmem:[%s614 + $0x28] sm:$0xf]
  %v626 = vld [vmem:[%s614 + $0x2c] sm:$0xf]
  %v627 = vld [vmem:[%s614 + $0x30] sm:$0xf]
  %v628 = vld [vmem:[%s614 + $0x34] sm:$0xf]
  %v629 = vld [vmem:[%s614 + $0x38] sm:$0xf]
  %v630 = vld [vmem:[%s614 + $0x3c] sm:$0xf]
  %v633 = vunpack.c.l.b16 %v55
  %v634 = vunpack.c.l.b16 %v56
  %v635 = vpack.c.b16 %v634, %v633
  %v653 = vunpack.c.l.b16 %v615
  %v654 = vunpack.c.l.b16 %v616
  %v655 = vunpack.c.l.b16 %v617
  %v656 = vunpack.c.l.b16 %v618
  %v657 = vunpack.c.l.b16 %v619
  %v658 = vunpack.c.l.b16 %v620
  %v659 = vunpack.c.l.b16 %v621
  %v660 = vunpack.c.l.b16 %v622
  %v661 = vunpack.c.l.b16 %v623
  %v662 = vunpack.c.l.b16 %v624
  %v663 = vunpack.c.l.b16 %v625
  %v664 = vunpack.c.l.b16 %v626
  %v665 = vunpack.c.l.b16 %v627
  %v666 = vunpack.c.l.b16 %v628
  %v667 = vunpack.c.l.b16 %v629
  %v668 = vunpack.c.l.b16 %v630
  %v669 = vpack.c.b16 %v654, %v653
  %v670 = vpack.c.b16 %v656, %v655
  %v671 = vpack.c.b16 %v658, %v657
  %v672 = vpack.c.b16 %v660, %v659
  %v673 = vpack.c.b16 %v662, %v661
  %v674 = vpack.c.b16 %v664, %v663
  %v675 = vpack.c.b16 %v666, %v665
  %v676 = vpack.c.b16 %v668, %v667
  %685 = vmatprep.subr.bf16.mxu0 0
  %686 = vmatpush1.bf16.msra.mxu0 %v669
  %687 = vmatprep.subr.bf16.mxu0 0
  %688 = vmatpush1.bf16.msra.mxu0 %v670
  %689 = vmatprep.subr.bf16.mxu0 0
  %690 = vmatpush1.bf16.msra.mxu0 %v671
  %691 = vmatprep.subr.bf16.mxu0 0
  %692 = vmatpush1.bf16.msra.mxu0 %v672
  %693 = vmatprep.subr.bf16.mxu0 0
  %694 = vmatpush1.bf16.msra.mxu0 %v673
  %695 = vmatprep.subr.bf16.mxu0 0
  %696 = vmatpush1.bf16.msra.mxu0 %v674
  %697 = vmatprep.subr.bf16.mxu0 0
  %698 = vmatpush1.bf16.msra.mxu0 %v675
  %699 = vmatprep.subr.bf16.mxu0 0
  %700 = vmatpush1.bf16.msra.mxu0 %v676
  %701 = vmatprep.subr.bf16.mxu0 0
  %702 = vmatpush1.bf16.msra.mxu0 0
  %703 = vmatprep.subr.bf16.mxu0 0
  %704 = vmatpush1.bf16.msra.mxu0 0
  %705 = vmatprep.subr.bf16.mxu0 0
  %706 = vmatpush1.bf16.msra.mxu0 0
  %707 = vmatprep.subr.bf16.mxu0 0
  %708 = vmatpush1.bf16.msra.mxu0 0
  %709 = vmatprep.subr.bf16.mxu0 0
  %710 = vmatpush1.bf16.msra.mxu0 0
  %711 = vmatprep.subr.bf16.mxu0 0
  %712 = vmatpush1.bf16.msra.mxu0 0
  %713 = vmatprep.subr.bf16.mxu0 0
  %714 = vmatpush1.bf16.msra.mxu0 0
  %715 = vmatprep.subr.bf16.mxu0 0
  %716 = vmatpush1.bf16.msra.mxu0 0
  %717 = vmatprep.mubr.bf16.mxu0 0
  %718 = vmatmul.mubr.bf16.gmra.mrb[0].mxu0 %v159
  %v719 = vpop.f32.mrb[0].mxu0
  %v720 = vadd.f32 0.0, %v719
  %v721 = vpop.f32.mrb[0].mxu0
  %v722 = vpop.f32.mrb[0].mxu0
  %v723 = vadd.f32 0.0, %v722
  %v724 = vpop.f32.mrb[0].mxu0
  %725 = vmatprep.mubr.bf16.mxu0 0
  %726 = vmatmul.mubr.bf16.gmra.mrb[0].mxu0 %v160
  %v727 = vpop.f32.mrb[0].mxu0
  %v728 = vadd.f32 0.0, %v727
  %v729 = vpop.f32.mrb[0].mxu0
  %v730 = vpop.f32.mrb[0].mxu0
  %v731 = vadd.f32 0.0, %v730
  %v732 = vpop.f32.mrb[0].mxu0
  %733 = vmatprep.mubr.bf16.mxu0 0
  %734 = vmatmul.mubr.bf16.gmra.mrb[0].mxu0 %v161
  %v735 = vpop.f32.mrb[0].mxu0
  %v736 = vadd.f32 0.0, %v735
  %v737 = vpop.f32.mrb[0].mxu0
  %v738 = vpop.f32.mrb[0].mxu0
  %v739 = vadd.f32 0.0, %v738
  %v740 = vpop.f32.mrb[0].mxu0
  %741 = vmatprep.mubr.bf16.mxu0 0
  %742 = vmatmul.mubr.bf16.gmra.mrb[0].mxu0 %v162
  %v743 = vpop.f32.mrb[0].mxu0
  %v744 = vadd.f32 0.0, %v743
  %v745 = vpop.f32.mrb[0].mxu0
  %v746 = vpop.f32.mrb[0].mxu0
  %v747 = vadd.f32 0.0, %v746
  %v748 = vpop.f32.mrb[0].mxu0
  %749 = vmatprep.mubr.bf16.mxu0 0
  %750 = vmatmul.mubr.bf16.gmra.mrb[0].mxu0 %v163
  %v751 = vpop.f32.mrb[0].mxu0
  %v752 = vadd.f32 0.0, %v751
  %v753 = vpop.f32.mrb[0].mxu0
  %v754 = vpop.f32.mrb[0].mxu0
  %v755 = vadd.f32 0.0, %v754
  %v756 = vpop.f32.mrb[0].mxu0
  %757 = vmatprep.mubr.bf16.mxu0 0
  %758 = vmatmul.mubr.bf16.gmra.mrb[0].mxu0 %v164
  %v759 = vpop.f32.mrb[0].mxu0
  %v760 = vadd.f32 0.0, %v759
  %v761 = vpop.f32.mrb[0].mxu0
  %v762 = vpop.f32.mrb[0].mxu0
  %v763 = vadd.f32 0.0, %v762
  %v764 = vpop.f32.mrb[0].mxu0
  %765 = vmatprep.mubr.bf16.mxu0 0
  %766 = vmatmul.mubr.bf16.gmra.mrb[0].mxu0 %v165
  %v767 = vpop.f32.mrb[0].mxu0
  %v768 = vadd.f32 0.0, %v767
  %v769 = vpop.f32.mrb[0].mxu0
  %v770 = vpop.f32.mrb[0].mxu0
  %v771 = vadd.f32 0.0, %v770
  %v772 = vpop.f32.mrb[0].mxu0
  %773 = vmatprep.mubr.bf16.mxu0 0
  %774 = vmatmul.mubr.bf16.gmra.mrb[0].mxu0 %v166
  %v775 = vpop.f32.mrb[0].mxu0
  %v776 = vadd.f32 0.0, %v775
  %v777 = vpop.f32.mrb[0].mxu0
  %v778 = vpop.f32.mrb[0].mxu0
  %v779 = vadd.f32 0.0, %v778
  %v780 = vpop.f32.mrb[0].mxu0
  %781 = vmatprep.mubr.bf16.mxu0 0
  %782 = vmatmul.mubr.bf16.gmra.mrb[0].mxu0 %v167
  %v783 = vpop.f32.mrb[0].mxu0
  %v784 = vadd.f32 0.0, %v783
  %v785 = vpop.f32.mrb[0].mxu0
  %v786 = vpop.f32.mrb[0].mxu0
  %v787 = vadd.f32 0.0, %v786
  %v788 = vpop.f32.mrb[0].mxu0
  %789 = vmatprep.mubr.bf16.mxu0 0
  %790 = vmatmul.mubr.bf16.gmra.mrb[0].mxu0 %v168
  %v791 = vpop.f32.mrb[0].mxu0
  %v792 = vadd.f32 0.0, %v791
  %v793 = vpop.f32.mrb[0].mxu0
  %v794 = vpop.f32.mrb[0].mxu0
  %v795 = vadd.f32 0.0, %v794
  %v796 = vpop.f32.mrb[0].mxu0
  %797 = vmatprep.mubr.bf16.mxu0 0
  %798 = vmatmul.mubr.bf16.gmra.mrb[0].mxu0 %v169
  %v799 = vpop.f32.mrb[0].mxu0
  %v800 = vadd.f32 0.0, %v799
  %v801 = vpop.f32.mrb[0].mxu0
  %v802 = vpop.f32.mrb[0].mxu0
  %v803 = vadd.f32 0.0, %v802
  %v804 = vpop.f32.mrb[0].mxu0
  %805 = vmatprep.mubr.bf16.mxu0 0
  %806 = vmatmul.mubr.bf16.gmra.mrb[0].mxu0 %v170
  %v807 = vpop.f32.mrb[0].mxu0
  %v808 = vadd.f32 0.0, %v807
  %v809 = vpop.f32.mrb[0].mxu0
  %v810 = vpop.f32.mrb[0].mxu0
  %v811 = vadd.f32 0.0, %v810
  %v812 = vpop.f32.mrb[0].mxu0
  %813 = vmatprep.mubr.bf16.mxu0 0
  %814 = vmatmul.mubr.bf16.gmra.mrb[0].mxu0 %v171
  %v815 = vpop.f32.mrb[0].mxu0
  %v816 = vadd.f32 0.0, %v815
  %v817 = vpop.f32.mrb[0].mxu0
  %v818 = vpop.f32.mrb[0].mxu0
  %v819 = vadd.f32 0.0, %v818
  %v820 = vpop.f32.mrb[0].mxu0
  %821 = vmatprep.mubr.bf16.mxu0 0
  %822 = vmatmul.mubr.bf16.gmra.mrb[0].mxu0 %v172
  %v823 = vpop.f32.mrb[0].mxu0
  %v824 = vadd.f32 0.0, %v823
  %v825 = vpop.f32.mrb[0].mxu0
  %v826 = vpop.f32.mrb[0].mxu0
  %v827 = vadd.f32 0.0, %v826
  %v828 = vpop.f32.mrb[0].mxu0
  %829 = vmatprep.mubr.bf16.mxu0 0
  %830 = vmatmul.mubr.bf16.gmra.mrb[0].mxu0 %v173
  %v831 = vpop.f32.mrb[0].mxu0
  %v832 = vadd.f32 0.0, %v831
  %v833 = vpop.f32.mrb[0].mxu0
  %v834 = vpop.f32.mrb[0].mxu0
  %v835 = vadd.f32 0.0, %v834
  %v836 = vpop.f32.mrb[0].mxu0
  %837 = vmatprep.mubr.bf16.mxu0 0
  %838 = vmatmul.mubr.bf16.gmra.mrb[0].mxu0 %v635
  %v839 = vpop.f32.mrb[0].mxu0
  %v840 = vadd.f32 0.0, %v839
  %v841 = vpop.f32.mrb[0].mxu0
  %v842 = vpop.f32.mrb[0].mxu0
  %v843 = vadd.f32 0.0, %v842
  %v844 = vpop.f32.mrb[0].mxu0
  %845 = vdwg.mxu0
  %v846 = vadd.f32 %v488, %v720
  %v847 = vadd.f32 %v491, %v723
  %v848 = vadd.f32 %v496, %v728
  %v849 = vadd.f32 %v499, %v731
  %v850 = vadd.f32 %v504, %v736
  %v851 = vadd.f32 %v507, %v739
  %v852 = vadd.f32 %v512, %v744
  %v853 = vadd.f32 %v515, %v747
  %v854 = vadd.f32 %v520, %v752
  %v855 = vadd.f32 %v523, %v755
  %v856 = vadd.f32 %v528, %v760
  %v857 = vadd.f32 %v531, %v763
  %v858 = vadd.f32 %v536, %v768
  %v859 = vadd.f32 %v539, %v771
  %v860 = vadd.f32 %v544, %v776
  %v861 = vadd.f32 %v547, %v779
  %v862 = vadd.f32 %v552, %v784
  %v863 = vadd.f32 %v555, %v787
  %v864 = vadd.f32 %v560, %v792
  %v865 = vadd.f32 %v563, %v795
  %v866 = vadd.f32 %v568, %v800
  %v867 = vadd.f32 %v571, %v803
  %v868 = vadd.f32 %v576, %v808
  %v869 = vadd.f32 %v579, %v811
  %v870 = vadd.f32 %v584, %v816
  %v871 = vadd.f32 %v587, %v819
  %v872 = vadd.f32 %v592, %v824
  %v873 = vadd.f32 %v595, %v827
  %v874 = vadd.f32 %v600, %v832
  %v875 = vadd.f32 %v603, %v835
  %v876 = vadd.f32 %v608, %v840
  %v877 = vadd.f32 %v611, %v843
  %s878 = scalar_lea.vmem %s1, 192
  %v879 = vld [vmem:[%s878] sm:$0xf]
  %v880 = vld [vmem:[%s878 + $0x4] sm:$0xf]
  %v881 = vld [vmem:[%s878 + $0x8] sm:$0xf]
  %v882 = vld [vmem:[%s878 + $0xc] sm:$0xf]
  %v883 = vld [vmem:[%s878 + $0x10] sm:$0xf]
  %v884 = vld [vmem:[%s878 + $0x14] sm:$0xf]
  %v885 = vld [vmem:[%s878 + $0x18] sm:$0xf]
  %v886 = vld [vmem:[%s878 + $0x1c] sm:$0xf]
  %v887 = vld [vmem:[%s878 + $0x20] sm:$0xf]
  %v888 = vld [vmem:[%s878 + $0x24] sm:$0xf]
  %v889 = vld [vmem:[%s878 + $0x28] sm:$0xf]
  %v890 = vld [vmem:[%s878 + $0x2c] sm:$0xf]
  %v891 = vld [vmem:[%s878 + $0x30] sm:$0xf]
  %v892 = vld [vmem:[%s878 + $0x34] sm:$0xf]
  %v893 = vld [vmem:[%s878 + $0x38] sm:$0xf]
  %v894 = vld [vmem:[%s878 + $0x3c] sm:$0xf]
  %v897 = vunpack.c.l.b16 %v57
  %v898 = vunpack.c.l.b16 %v58
  %v899 = vpack.c.b16 %v898, %v897
  %v917 = vunpack.c.l.b16 %v879
  %v918 = vunpack.c.l.b16 %v880
  %v919 = vunpack.c.l.b16 %v881
  %v920 = vunpack.c.l.b16 %v882
  %v921 = vunpack.c.l.b16 %v883
  %v922 = vunpack.c.l.b16 %v884
  %v923 = vunpack.c.l.b16 %v885
  %v924 = vunpack.c.l.b16 %v886
  %v925 = vunpack.c.l.b16 %v887
  %v926 = vunpack.c.l.b16 %v888
  %v927 = vunpack.c.l.b16 %v889
  %v928 = vunpack.c.l.b16 %v890
  %v929 = vunpack.c.l.b16 %v891
  %v930 = vunpack.c.l.b16 %v892
  %v931 = vunpack.c.l.b16 %v893
  %v932 = vunpack.c.l.b16 %v894
  %v933 = vpack.c.b16 %v918, %v917
  %v934 = vpack.c.b16 %v920, %v919
  %v935 = vpack.c.b16 %v922, %v921
  %v936 = vpack.c.b16 %v924, %v923
  %v937 = vpack.c.b16 %v926, %v925
  %v938 = vpack.c.b16 %v928, %v927
  %v939 = vpack.c.b16 %v930, %v929
  %v940 = vpack.c.b16 %v932, %v931
  %949 = vmatprep.subr.bf16.mxu0 0
  %950 = vmatpush1.bf16.msra.mxu0 %v933
  %951 = vmatprep.subr.bf16.mxu0 0
  %952 = vmatpush1.bf16.msra.mxu0 %v934
  %953 = vmatprep.subr.bf16.mxu0 0
  %954 = vmatpush1.bf16.msra.mxu0 %v935
  %955 = vmatprep.subr.bf16.mxu0 0
  %956 = vmatpush1.bf16.msra.mxu0 %v936
  %957 = vmatprep.subr.bf16.mxu0 0
  %958 = vmatpush1.bf16.msra.mxu0 %v937
  %959 = vmatprep.subr.bf16.mxu0 0
  %960 = vmatpush1.bf16.msra.mxu0 %v938
  %961 = vmatprep.subr.bf16.mxu0 0
  %962 = vmatpush1.bf16.msra.mxu0 %v939
  %963 = vmatprep.subr.bf16.mxu0 0
  %964 = vmatpush1.bf16.msra.mxu0 %v940
  %965 = vmatprep.subr.bf16.mxu0 0
  %966 = vmatpush1.bf16.msra.mxu0 0
  %967 = vmatprep.subr.bf16.mxu0 0
  %968 = vmatpush1.bf16.msra.mxu0 0
  %969 = vmatprep.subr.bf16.mxu0 0
  %970 = vmatpush1.bf16.msra.mxu0 0
  %971 = vmatprep.subr.bf16.mxu0 0
  %972 = vmatpush1.bf16.msra.mxu0 0
  %973 = vmatprep.subr.bf16.mxu0 0
  %974 = vmatpush1.bf16.msra.mxu0 0
  %975 = vmatprep.subr.bf16.mxu0 0
  %976 = vmatpush1.bf16.msra.mxu0 0
  %977 = vmatprep.subr.bf16.mxu0 0
  %978 = vmatpush1.bf16.msra.mxu0 0
  %979 = vmatprep.subr.bf16.mxu0 0
  %980 = vmatpush1.bf16.msra.mxu0 0
  %981 = vmatprep.mubr.bf16.mxu0 0
  %982 = vmatmul.mubr.bf16.gmra.mrb[0].mxu0 %v160
  %v983 = vpop.f32.mrb[0].mxu0
  %v984 = vadd.f32 0.0, %v983
  %v985 = vpop.f32.mrb[0].mxu0
  %v986 = vpop.f32.mrb[0].mxu0
  %v987 = vadd.f32 0.0, %v986
  %v988 = vpop.f32.mrb[0].mxu0
  %989 = vmatprep.mubr.bf16.mxu0 0
  %990 = vmatmul.mubr.bf16.gmra.mrb[0].mxu0 %v161
  %v991 = vpop.f32.mrb[0].mxu0
  %v992 = vadd.f32 0.0, %v991
  %v993 = vpop.f32.mrb[0].mxu0
  %v994 = vpop.f32.mrb[0].mxu0
  %v995 = vadd.f32 0.0, %v994
  %v996 = vpop.f32.mrb[0].mxu0
  %997 = vmatprep.mubr.bf16.mxu0 0
  %998 = vmatmul.mubr.bf16.gmra.mrb[0].mxu0 %v162
  %v999 = vpop.f32.mrb[0].mxu0
  %v1000 = vadd.f32 0.0, %v999
  %v1001 = vpop.f32.mrb[0].mxu0
  %v1002 = vpop.f32.mrb[0].mxu0
  %v1003 = vadd.f32 0.0, %v1002
  %v1004 = vpop.f32.mrb[0].mxu0
  %1005 = vmatprep.mubr.bf16.mxu0 0
  %1006 = vmatmul.mubr.bf16.gmra.mrb[0].mxu0 %v163
  %v1007 = vpop.f32.mrb[0].mxu0
  %v1008 = vadd.f32 0.0, %v1007
  %v1009 = vpop.f32.mrb[0].mxu0
  %v1010 = vpop.f32.mrb[0].mxu0
  %v1011 = vadd.f32 0.0, %v1010
  %v1012 = vpop.f32.mrb[0].mxu0
  %1013 = vmatprep.mubr.bf16.mxu0 0
  %1014 = vmatmul.mubr.bf16.gmra.mrb[0].mxu0 %v164
  %v1015 = vpop.f32.mrb[0].mxu0
  %v1016 = vadd.f32 0.0, %v1015
  %v1017 = vpop.f32.mrb[0].mxu0
  %v1018 = vpop.f32.mrb[0].mxu0
  %v1019 = vadd.f32 0.0, %v1018
  %v1020 = vpop.f32.mrb[0].mxu0
  %1021 = vmatprep.mubr.bf16.mxu0 0
  %1022 = vmatmul.mubr.bf16.gmra.mrb[0].mxu0 %v165
  %v1023 = vpop.f32.mrb[0].mxu0
  %v1024 = vadd.f32 0.0, %v1023
  %v1025 = vpop.f32.mrb[0].mxu0
  %v1026 = vpop.f32.mrb[0].mxu0
  %v1027 = vadd.f32 0.0, %v1026
  %v1028 = vpop.f32.mrb[0].mxu0
  %1029 = vmatprep.mubr.bf16.mxu0 0
  %1030 = vmatmul.mubr.bf16.gmra.mrb[0].mxu0 %v166
  %v1031 = vpop.f32.mrb[0].mxu0
  %v1032 = vadd.f32 0.0, %v1031
  %v1033 = vpop.f32.mrb[0].mxu0
  %v1034 = vpop.f32.mrb[0].mxu0
  %v1035 = vadd.f32 0.0, %v1034
  %v1036 = vpop.f32.mrb[0].mxu0
  %1037 = vmatprep.mubr.bf16.mxu0 0
  %1038 = vmatmul.mubr.bf16.gmra.mrb[0].mxu0 %v167
  %v1039 = vpop.f32.mrb[0].mxu0
  %v1040 = vadd.f32 0.0, %v1039
  %v1041 = vpop.f32.mrb[0].mxu0
  %v1042 = vpop.f32.mrb[0].mxu0
  %v1043 = vadd.f32 0.0, %v1042
  %v1044 = vpop.f32.mrb[0].mxu0
  %1045 = vmatprep.mubr.bf16.mxu0 0
  %1046 = vmatmul.mubr.bf16.gmra.mrb[0].mxu0 %v168
  %v1047 = vpop.f32.mrb[0].mxu0
  %v1048 = vadd.f32 0.0, %v1047
  %v1049 = vpop.f32.mrb[0].mxu0
  %v1050 = vpop.f32.mrb[0].mxu0
  %v1051 = vadd.f32 0.0, %v1050
  %v1052 = vpop.f32.mrb[0].mxu0
  %1053 = vmatprep.mubr.bf16.mxu0 0
  %1054 = vmatmul.mubr.bf16.gmra.mrb[0].mxu0 %v169
  %v1055 = vpop.f32.mrb[0].mxu0
  %v1056 = vadd.f32 0.0, %v1055
  %v1057 = vpop.f32.mrb[0].mxu0
  %v1058 = vpop.f32.mrb[0].mxu0
  %v1059 = vadd.f32 0.0, %v1058
  %v1060 = vpop.f32.mrb[0].mxu0
  %1061 = vmatprep.mubr.bf16.mxu0 0
  %1062 = vmatmul.mubr.bf16.gmra.mrb[0].mxu0 %v170
  %v1063 = vpop.f32.mrb[0].mxu0
  %v1064 = vadd.f32 0.0, %v1063
  %v1065 = vpop.f32.mrb[0].mxu0
  %v1066 = vpop.f32.mrb[0].mxu0
  %v1067 = vadd.f32 0.0, %v1066
  %v1068 = vpop.f32.mrb[0].mxu0
  %1069 = vmatprep.mubr.bf16.mxu0 0
  %1070 = vmatmul.mubr.bf16.gmra.mrb[0].mxu0 %v171
  %v1071 = vpop.f32.mrb[0].mxu0
  %v1072 = vadd.f32 0.0, %v1071
  %v1073 = vpop.f32.mrb[0].mxu0
  %v1074 = vpop.f32.mrb[0].mxu0
  %v1075 = vadd.f32 0.0, %v1074
  %v1076 = vpop.f32.mrb[0].mxu0
  %1077 = vmatprep.mubr.bf16.mxu0 0
  %1078 = vmatmul.mubr.bf16.gmra.mrb[0].mxu0 %v172
  %v1079 = vpop.f32.mrb[0].mxu0
  %v1080 = vadd.f32 0.0, %v1079
  %v1081 = vpop.f32.mrb[0].mxu0
  %v1082 = vpop.f32.mrb[0].mxu0
  %v1083 = vadd.f32 0.0, %v1082
  %v1084 = vpop.f32.mrb[0].mxu0
  %1085 = vmatprep.mubr.bf16.mxu0 0
  %1086 = vmatmul.mubr.bf16.gmra.mrb[0].mxu0 %v173
  %v1087 = vpop.f32.mrb[0].mxu0
  %v1088 = vadd.f32 0.0, %v1087
  %v1089 = vpop.f32.mrb[0].mxu0
  %v1090 = vpop.f32.mrb[0].mxu0
  %v1091 = vadd.f32 0.0, %v1090
  %v1092 = vpop.f32.mrb[0].mxu0
  %1093 = vmatprep.mubr.bf16.mxu0 0
  %1094 = vmatmul.mubr.bf16.gmra.mrb[0].mxu0 %v635
  %v1095 = vpop.f32.mrb[0].mxu0
  %v1096 = vadd.f32 0.0, %v1095
  %v1097 = vpop.f32.mrb[0].mxu0
  %v1098 = vpop.f32.mrb[0].mxu0
  %v1099 = vadd.f32 0.0, %v1098
  %v1100 = vpop.f32.mrb[0].mxu0
  %1101 = vmatprep.mubr.bf16.mxu0 0
  %1102 = vmatmul.mubr.bf16.gmra.mrb[0].mxu0 %v899
  %v1103 = vpop.f32.mrb[0].mxu0
  %v1104 = vadd.f32 0.0, %v1103
  %v1105 = vpop.f32.mrb[0].mxu0
  %v1106 = vpop.f32.mrb[0].mxu0
  %v1107 = vadd.f32 0.0, %v1106
  %v1108 = vpop.f32.mrb[0].mxu0
  %1109 = vdwg.mxu0
  %v1110 = vadd.f32 %v846, %v984
  %v1111 = vadd.f32 %v847, %v987
  %v1112 = vadd.f32 %v848, %v992
  %v1113 = vadd.f32 %v849, %v995
  %v1114 = vadd.f32 %v850, %v1000
  %v1115 = vadd.f32 %v851, %v1003
  %v1116 = vadd.f32 %v852, %v1008
  %v1117 = vadd.f32 %v853, %v1011
  %v1118 = vadd.f32 %v854, %v1016
  %v1119 = vadd.f32 %v855, %v1019
  %v1120 = vadd.f32 %v856, %v1024
  %v1121 = vadd.f32 %v857, %v1027
  %v1122 = vadd.f32 %v858, %v1032
  %v1123 = vadd.f32 %v859, %v1035
  %v1124 = vadd.f32 %v860, %v1040
  %v1125 = vadd.f32 %v861, %v1043
  %v1126 = vadd.f32 %v862, %v1048
  %v1127 = vadd.f32 %v863, %v1051
  %v1128 = vadd.f32 %v864, %v1056
  %v1129 = vadd.f32 %v865, %v1059
  %v1130 = vadd.f32 %v866, %v1064
  %v1131 = vadd.f32 %v867, %v1067
  %v1132 = vadd.f32 %v868, %v1072
  %v1133 = vadd.f32 %v869, %v1075
  %v1134 = vadd.f32 %v870, %v1080
  %v1135 = vadd.f32 %v871, %v1083
  %v1136 = vadd.f32 %v872, %v1088
  %v1137 = vadd.f32 %v873, %v1091
  %v1138 = vadd.f32 %v874, %v1096
  %v1139 = vadd.f32 %v875, %v1099
  %v1140 = vadd.f32 %v876, %v1104
  %v1141 = vadd.f32 %v877, %v1107
  %s1142 = scalar_lea.vmem %s1, 256
  %v1143 = vld [vmem:[%s1142] sm:$0xf]
  %v1144 = vld [vmem:[%s1142 + $0x4] sm:$0xf]
  %v1145 = vld [vmem:[%s1142 + $0x8] sm:$0xf]
  %v1146 = vld [vmem:[%s1142 + $0xc] sm:$0xf]
  %v1147 = vld [vmem:[%s1142 + $0x10] sm:$0xf]
  %v1148 = vld [vmem:[%s1142 + $0x14] sm:$0xf]
  %v1149 = vld [vmem:[%s1142 + $0x18] sm:$0xf]
  %v1150 = vld [vmem:[%s1142 + $0x1c] sm:$0xf]
  %v1151 = vld [vmem:[%s1142 + $0x20] sm:$0xf]
  %v1152 = vld [vmem:[%s1142 + $0x24] sm:$0xf]
  %v1153 = vld [vmem:[%s1142 + $0x28] sm:$0xf]
  %v1154 = vld [vmem:[%s1142 + $0x2c] sm:$0xf]
  %v1155 = vld [vmem:[%s1142 + $0x30] sm:$0xf]
  %v1156 = vld [vmem:[%s1142 + $0x34] sm:$0xf]
  %v1157 = vld [vmem:[%s1142 + $0x38] sm:$0xf]
  %v1158 = vld [vmem:[%s1142 + $0x3c] sm:$0xf]
  %v1161 = vunpack.c.l.b16 %v59
  %v1162 = vunpack.c.l.b16 %v60
  %v1163 = vpack.c.b16 %v1162, %v1161
  %v1181 = vunpack.c.l.b16 %v1143
  %v1182 = vunpack.c.l.b16 %v1144
  %v1183 = vunpack.c.l.b16 %v1145
  %v1184 = vunpack.c.l.b16 %v1146
  %v1185 = vunpack.c.l.b16 %v1147
  %v1186 = vunpack.c.l.b16 %v1148
  %v1187 = vunpack.c.l.b16 %v1149
  %v1188 = vunpack.c.l.b16 %v1150
  %v1189 = vunpack.c.l.b16 %v1151
  %v1190 = vunpack.c.l.b16 %v1152
  %v1191 = vunpack.c.l.b16 %v1153
  %v1192 = vunpack.c.l.b16 %v1154
  %v1193 = vunpack.c.l.b16 %v1155
  %v1194 = vunpack.c.l.b16 %v1156
  %v1195 = vunpack.c.l.b16 %v1157
  %v1196 = vunpack.c.l.b16 %v1158
  %v1197 = vpack.c.b16 %v1182, %v1181
  %v1198 = vpack.c.b16 %v1184, %v1183
  %v1199 = vpack.c.b16 %v1186, %v1185
  %v1200 = vpack.c.b16 %v1188, %v1187
  %v1201 = vpack.c.b16 %v1190, %v1189
  %v1202 = vpack.c.b16 %v1192, %v1191
  %v1203 = vpack.c.b16 %v1194, %v1193
  %v1204 = vpack.c.b16 %v1196, %v1195
  %1213 = vmatprep.subr.bf16.mxu0 0
  %1214 = vmatpush1.bf16.msra.mxu0 %v1197
  %1215 = vmatprep.subr.bf16.mxu0 0
  %1216 = vmatpush1.bf16.msra.mxu0 %v1198
  %1217 = vmatprep.subr.bf16.mxu0 0
  %1218 = vmatpush1.bf16.msra.mxu0 %v1199
  %1219 = vmatprep.subr.bf16.mxu0 0
  %1220 = vmatpush1.bf16.msra.mxu0 %v1200
  %1221 = vmatprep.subr.bf16.mxu0 0
  %1222 = vmatpush1.bf16.msra.mxu0 %v1201
  %1223 = vmatprep.subr.bf16.mxu0 0
  %1224 = vmatpush1.bf16.msra.mxu0 %v1202
  %1225 = vmatprep.subr.bf16.mxu0 0
  %1226 = vmatpush1.bf16.msra.mxu0 %v1203
  %1227 = vmatprep.subr.bf16.mxu0 0
  %1228 = vmatpush1.bf16.msra.mxu0 %v1204
  %1229 = vmatprep.subr.bf16.mxu0 0
  %1230 = vmatpush1.bf16.msra.mxu0 0
  %1231 = vmatprep.subr.bf16.mxu0 0
  %1232 = vmatpush1.bf16.msra.mxu0 0
  %1233 = vmatprep.subr.bf16.mxu0 0
  %1234 = vmatpush1.bf16.msra.mxu0 0
  %1235 = vmatprep.subr.bf16.mxu0 0
  %1236 = vmatpush1.bf16.msra.mxu0 0
  %1237 = vmatprep.subr.bf16.mxu0 0
  %1238 = vmatpush1.bf16.msra.mxu0 0
  %1239 = vmatprep.subr.bf16.mxu0 0
  %1240 = vmatpush1.bf16.msra.mxu0 0
  %1241 = vmatprep.subr.bf16.mxu0 0
  %1242 = vmatpush1.bf16.msra.mxu0 0
  %1243 = vmatprep.subr.bf16.mxu0 0
  %1244 = vmatpush1.bf16.msra.mxu0 0
  %1245 = vmatprep.mubr.bf16.mxu0 0
  %1246 = vmatmul.mubr.bf16.gmra.mrb[0].mxu0 %v161
  %v1247 = vpop.f32.mrb[0].mxu0
  %v1248 = vadd.f32 0.0, %v1247
  %v1249 = vpop.f32.mrb[0].mxu0
  %v1250 = vpop.f32.mrb[0].mxu0
  %v1251 = vadd.f32 0.0, %v1250
  %v1252 = vpop.f32.mrb[0].mxu0
  %1253 = vmatprep.mubr.bf16.mxu0 0
  %1254 = vmatmul.mubr.bf16.gmra.mrb[0].mxu0 %v162
  %v1255 = vpop.f32.mrb[0].mxu0
  %v1256 = vadd.f32 0.0, %v1255
  %v1257 = vpop.f32.mrb[0].mxu0
  %v1258 = vpop.f32.mrb[0].mxu0
  %v1259 = vadd.f32 0.0, %v1258
  %v1260 = vpop.f32.mrb[0].mxu0
  %1261 = vmatprep.mubr.bf16.mxu0 0
  %1262 = vmatmul.mubr.bf16.gmra.mrb[0].mxu0 %v163
  %v1263 = vpop.f32.mrb[0].mxu0
  %v1264 = vadd.f32 0.0, %v1263
  %v1265 = vpop.f32.mrb[0].mxu0
  %v1266 = vpop.f32.mrb[0].mxu0
  %v1267 = vadd.f32 0.0, %v1266
  %v1268 = vpop.f32.mrb[0].mxu0
  %1269 = vmatprep.mubr.bf16.mxu0 0
  %1270 = vmatmul.mubr.bf16.gmra.mrb[0].mxu0 %v164
  %v1271 = vpop.f32.mrb[0].mxu0
  %v1272 = vadd.f32 0.0, %v1271
  %v1273 = vpop.f32.mrb[0].mxu0
  %v1274 = vpop.f32.mrb[0].mxu0
  %v1275 = vadd.f32 0.0, %v1274
  %v1276 = vpop.f32.mrb[0].mxu0
  %1277 = vmatprep.mubr.bf16.mxu0 0
  %1278 = vmatmul.mubr.bf16.gmra.mrb[0].mxu0 %v165
  %v1279 = vpop.f32.mrb[0].mxu0
  %v1280 = vadd.f32 0.0, %v1279
  %v1281 = vpop.f32.mrb[0].mxu0
  %v1282 = vpop.f32.mrb[0].mxu0
  %v1283 = vadd.f32 0.0, %v1282
  %v1284 = vpop.f32.mrb[0].mxu0
  %1285 = vmatprep.mubr.bf16.mxu0 0
  %1286 = vmatmul.mubr.bf16.gmra.mrb[0].mxu0 %v166
  %v1287 = vpop.f32.mrb[0].mxu0
  %v1288 = vadd.f32 0.0, %v1287
  %v1289 = vpop.f32.mrb[0].mxu0
  %v1290 = vpop.f32.mrb[0].mxu0
  %v1291 = vadd.f32 0.0, %v1290
  %v1292 = vpop.f32.mrb[0].mxu0
  %1293 = vmatprep.mubr.bf16.mxu0 0
  %1294 = vmatmul.mubr.bf16.gmra.mrb[0].mxu0 %v167
  %v1295 = vpop.f32.mrb[0].mxu0
  %v1296 = vadd.f32 0.0, %v1295
  %v1297 = vpop.f32.mrb[0].mxu0
  %v1298 = vpop.f32.mrb[0].mxu0
  %v1299 = vadd.f32 0.0, %v1298
  %v1300 = vpop.f32.mrb[0].mxu0
  %1301 = vmatprep.mubr.bf16.mxu0 0
  %1302 = vmatmul.mubr.bf16.gmra.mrb[0].mxu0 %v168
  %v1303 = vpop.f32.mrb[0].mxu0
  %v1304 = vadd.f32 0.0, %v1303
  %v1305 = vpop.f32.mrb[0].mxu0
  %v1306 = vpop.f32.mrb[0].mxu0
  %v1307 = vadd.f32 0.0, %v1306
  %v1308 = vpop.f32.mrb[0].mxu0
  %1309 = vmatprep.mubr.bf16.mxu0 0
  %1310 = vmatmul.mubr.bf16.gmra.mrb[0].mxu0 %v169
  %v1311 = vpop.f32.mrb[0].mxu0
  %v1312 = vadd.f32 0.0, %v1311
  %v1313 = vpop.f32.mrb[0].mxu0
  %v1314 = vpop.f32.mrb[0].mxu0
  %v1315 = vadd.f32 0.0, %v1314
  %v1316 = vpop.f32.mrb[0].mxu0
  %1317 = vmatprep.mubr.bf16.mxu0 0
  %1318 = vmatmul.mubr.bf16.gmra.mrb[0].mxu0 %v170
  %v1319 = vpop.f32.mrb[0].mxu0
  %v1320 = vadd.f32 0.0, %v1319
  %v1321 = vpop.f32.mrb[0].mxu0
  %v1322 = vpop.f32.mrb[0].mxu0
  %v1323 = vadd.f32 0.0, %v1322
  %v1324 = vpop.f32.mrb[0].mxu0
  %1325 = vmatprep.mubr.bf16.mxu0 0
  %1326 = vmatmul.mubr.bf16.gmra.mrb[0].mxu0 %v171
  %v1327 = vpop.f32.mrb[0].mxu0
  %v1328 = vadd.f32 0.0, %v1327
  %v1329 = vpop.f32.mrb[0].mxu0
  %v1330 = vpop.f32.mrb[0].mxu0
  %v1331 = vadd.f32 0.0, %v1330
  %v1332 = vpop.f32.mrb[0].mxu0
  %1333 = vmatprep.mubr.bf16.mxu0 0
  %1334 = vmatmul.mubr.bf16.gmra.mrb[0].mxu0 %v172
  %v1335 = vpop.f32.mrb[0].mxu0
  %v1336 = vadd.f32 0.0, %v1335
  %v1337 = vpop.f32.mrb[0].mxu0
  %v1338 = vpop.f32.mrb[0].mxu0
  %v1339 = vadd.f32 0.0, %v1338
  %v1340 = vpop.f32.mrb[0].mxu0
  %1341 = vmatprep.mubr.bf16.mxu0 0
  %1342 = vmatmul.mubr.bf16.gmra.mrb[0].mxu0 %v173
  %v1343 = vpop.f32.mrb[0].mxu0
  %v1344 = vadd.f32 0.0, %v1343
  %v1345 = vpop.f32.mrb[0].mxu0
  %v1346 = vpop.f32.mrb[0].mxu0
  %v1347 = vadd.f32 0.0, %v1346
  %v1348 = vpop.f32.mrb[0].mxu0
  %1349 = vmatprep.mubr.bf16.mxu0 0
  %1350 = vmatmul.mubr.bf16.gmra.mrb[0].mxu0 %v635
  %v1351 = vpop.f32.mrb[0].mxu0
  %v1352 = vadd.f32 0.0, %v1351
  %v1353 = vpop.f32.mrb[0].mxu0
  %v1354 = vpop.f32.mrb[0].mxu0
  %v1355 = vadd.f32 0.0, %v1354
  %v1356 = vpop.f32.mrb[0].mxu0
  %1357 = vmatprep.mubr.bf16.mxu0 0
  %1358 = vmatmul.mubr.bf16.gmra.mrb[0].mxu0 %v899
  %v1359 = vpop.f32.mrb[0].mxu0
  %v1360 = vadd.f32 0.0, %v1359
  %v1361 = vpop.f32.mrb[0].mxu0
  %v1362 = vpop.f32.mrb[0].mxu0
  %v1363 = vadd.f32 0.0, %v1362
  %v1364 = vpop.f32.mrb[0].mxu0
  %1365 = vmatprep.mubr.bf16.mxu0 0
  %1366 = vmatmul.mubr.bf16.gmra.mrb[0].mxu0 %v1163
  %v1367 = vpop.f32.mrb[0].mxu0
  %v1368 = vadd.f32 0.0, %v1367
  %v1369 = vpop.f32.mrb[0].mxu0
  %v1370 = vpop.f32.mrb[0].mxu0
  %v1371 = vadd.f32 0.0, %v1370
  %v1372 = vpop.f32.mrb[0].mxu0
  %1373 = vdwg.mxu0
  %v1374 = vadd.f32 %v1110, %v1248
  %v1375 = vadd.f32 %v1111, %v1251
  %v1376 = vadd.f32 %v1112, %v1256
  %v1377 = vadd.f32 %v1113, %v1259
  %v1378 = vadd.f32 %v1114, %v1264
  %v1379 = vadd.f32 %v1115, %v1267
  %v1380 = vadd.f32 %v1116, %v1272
  %v1381 = vadd.f32 %v1117, %v1275
  %v1382 = vadd.f32 %v1118, %v1280
  %v1383 = vadd.f32 %v1119, %v1283
  %v1384 = vadd.f32 %v1120, %v1288
  %v1385 = vadd.f32 %v1121, %v1291
  %v1386 = vadd.f32 %v1122, %v1296
  %v1387 = vadd.f32 %v1123, %v1299
  %v1388 = vadd.f32 %v1124, %v1304
  %v1389 = vadd.f32 %v1125, %v1307
  %v1390 = vadd.f32 %v1126, %v1312
  %v1391 = vadd.f32 %v1127, %v1315
  %v1392 = vadd.f32 %v1128, %v1320
  %v1393 = vadd.f32 %v1129, %v1323
  %v1394 = vadd.f32 %v1130, %v1328
  %v1395 = vadd.f32 %v1131, %v1331
  %v1396 = vadd.f32 %v1132, %v1336
  %v1397 = vadd.f32 %v1133, %v1339
  %v1398 = vadd.f32 %v1134, %v1344
  %v1399 = vadd.f32 %v1135, %v1347
  %v1400 = vadd.f32 %v1136, %v1352
  %v1401 = vadd.f32 %v1137, %v1355
  %v1402 = vadd.f32 %v1138, %v1360
  %v1403 = vadd.f32 %v1139, %v1363
  %v1404 = vadd.f32 %v1140, %v1368
  %v1405 = vadd.f32 %v1141, %v1371
  %v1406 = vld [vmem:[%s2] sm:$0x1]
  %v1408 = vlaneseq
  %v1409 = vshrl.u32 %v1408, 7
  %v1410 = vsub.s32 0, %v1409
  %v1411 = vrot.slane %v1406, %v1410
  %v1413 = vadd.f32 %v1374, %v1411
  %v1414 = vadd.f32 %v1375, %v1411
  %v1415 = vadd.f32 %v1376, %v1411
  %v1416 = vadd.f32 %v1377, %v1411
  %v1417 = vadd.f32 %v1378, %v1411
  %v1418 = vadd.f32 %v1379, %v1411
  %v1419 = vadd.f32 %v1380, %v1411
  %v1420 = vadd.f32 %v1381, %v1411
  %v1421 = vadd.f32 %v1382, %v1411
  %v1422 = vadd.f32 %v1383, %v1411
  %v1423 = vadd.f32 %v1384, %v1411
  %v1424 = vadd.f32 %v1385, %v1411
  %v1425 = vadd.f32 %v1386, %v1411
  %v1426 = vadd.f32 %v1387, %v1411
  %v1427 = vadd.f32 %v1388, %v1411
  %v1428 = vadd.f32 %v1389, %v1411
  %v1429 = vadd.f32 %v1390, %v1411
  %v1430 = vadd.f32 %v1391, %v1411
  %v1431 = vadd.f32 %v1392, %v1411
  %v1432 = vadd.f32 %v1393, %v1411
  %v1433 = vadd.f32 %v1394, %v1411
  %v1434 = vadd.f32 %v1395, %v1411
  %v1435 = vadd.f32 %v1396, %v1411
  %v1436 = vadd.f32 %v1397, %v1411
  %v1437 = vadd.f32 %v1398, %v1411
  %v1438 = vadd.f32 %v1399, %v1411
  %v1439 = vadd.f32 %v1400, %v1411
  %v1440 = vadd.f32 %v1401, %v1411
  %v1441 = vadd.f32 %v1402, %v1411
  %v1442 = vadd.f32 %v1403, %v1411
  %v1443 = vadd.f32 %v1404, %v1411
  %v1444 = vadd.f32 %v1405, %v1411
  %v1445 = vmax.f32 %v1413, 0.0
  %v1446 = vmax.f32 %v1414, 0.0
  %v1447 = vmax.f32 %v1415, 0.0
  %v1448 = vmax.f32 %v1416, 0.0
  %v1449 = vmax.f32 %v1417, 0.0
  %v1450 = vmax.f32 %v1418, 0.0
  %v1451 = vmax.f32 %v1419, 0.0
  %v1452 = vmax.f32 %v1420, 0.0
  %v1453 = vmax.f32 %v1421, 0.0
  %v1454 = vmax.f32 %v1422, 0.0
  %v1455 = vmax.f32 %v1423, 0.0
  %v1456 = vmax.f32 %v1424, 0.0
  %v1457 = vmax.f32 %v1425, 0.0
  %v1458 = vmax.f32 %v1426, 0.0
  %v1459 = vmax.f32 %v1427, 0.0
  %v1460 = vmax.f32 %v1428, 0.0
  %v1461 = vmax.f32 %v1429, 0.0
  %v1462 = vmax.f32 %v1430, 0.0
  %v1463 = vmax.f32 %v1431, 0.0
  %v1464 = vmax.f32 %v1432, 0.0
  %v1465 = vmax.f32 %v1433, 0.0
  %v1466 = vmax.f32 %v1434, 0.0
  %v1467 = vmax.f32 %v1435, 0.0
  %v1468 = vmax.f32 %v1436, 0.0
  %v1469 = vmax.f32 %v1437, 0.0
  %v1470 = vmax.f32 %v1438, 0.0
  %v1471 = vmax.f32 %v1439, 0.0
  %v1472 = vmax.f32 %v1440, 0.0
  %v1473 = vmax.f32 %v1441, 0.0
  %v1474 = vmax.f32 %v1442, 0.0
  %v1475 = vmax.f32 %v1443, 0.0
  %v1476 = vmax.f32 %v1444, 0.0
  %v1477 = vlaneseq
  %v1478 = vand.u32 %v1477, 127
  %vm1479 = vcmp.ge.s32.totalorder %v1478, 0
  %vm1480 = vcmp.lt.s32.totalorder %v1478, 8
  %vm1481 = vmand %vm1479, %vm1480
  %v1482 = vsel %vm1481, 14, 0
  %vm1483 = vcmp.ge.s32.totalorder %v1478, 8
  %vm1484 = vcmp.lt.s32.totalorder %v1478, 16
  %vm1485 = vmand %vm1483, %vm1484
  %v1486 = vsel %vm1485, 13, %v1482
  %vm1487 = vcmp.ge.s32.totalorder %v1478, 16
  %vm1488 = vcmp.lt.s32.totalorder %v1478, 24
  %vm1489 = vmand %vm1487, %vm1488
  %v1490 = vsel %vm1489, 12, %v1486
  %vm1491 = vcmp.gt.s32.totalorder %v1490, 0
  %vm1492 = vcmp.gt.s32.totalorder %v1490, 1
  %vm1493 = vcmp.gt.s32.totalorder %v1490, 2
  %vm1494 = vcmp.gt.s32.totalorder %v1490, 3
  %vm1495 = vcmp.gt.s32.totalorder %v1490, 4
  %vm1496 = vcmp.gt.s32.totalorder %v1490, 5
  %vm1497 = vcmp.gt.s32.totalorder %v1490, 6
  %vm1498 = vcmp.gt.s32.totalorder %v1490, 7
  %vm1499 = vcmp.gt.s32.totalorder %v1490, 8
  %vm1500 = vcmp.gt.s32.totalorder %v1490, 9
  %vm1501 = vcmp.gt.s32.totalorder %v1490, 10
  %vm1502 = vcmp.gt.s32.totalorder %v1490, 11
  %vm1503 = vcmp.gt.s32.totalorder %v1490, 12
  %vm1504 = vcmp.gt.s32.totalorder %v1490, 13
  %vm1505 = vcmp.gt.s32.totalorder %v1490, 14
  %vm1506 = vcmp.gt.s32.totalorder %v1490, 15
  %v1507 = vsel %vm1491, %v1445, 0.0
  %v1508 = vsel %vm1491, %v1446, 0.0
  %v1509 = vsel %vm1492, %v1447, 0.0
  %v1510 = vsel %vm1492, %v1448, 0.0
  %v1511 = vsel %vm1493, %v1449, 0.0
  %v1512 = vsel %vm1493, %v1450, 0.0
  %v1513 = vsel %vm1494, %v1451, 0.0
  %v1514 = vsel %vm1494, %v1452, 0.0
  %v1515 = vsel %vm1495, %v1453, 0.0
  %v1516 = vsel %vm1495, %v1454, 0.0
  %v1517 = vsel %vm1496, %v1455, 0.0
  %v1518 = vsel %vm1496, %v1456, 0.0
  %v1519 = vsel %vm1497, %v1457, 0.0
  %v1520 = vsel %vm1497, %v1458, 0.0
  %v1521 = vsel %vm1498, %v1459, 0.0
  %v1522 = vsel %vm1498, %v1460, 0.0
  %v1523 = vsel %vm1499, %v1461, 0.0
  %v1524 = vsel %vm1499, %v1462, 0.0
  %v1525 = vsel %vm1500, %v1463, 0.0
  %v1526 = vsel %vm1500, %v1464, 0.0
  %v1527 = vsel %vm1501, %v1465, 0.0
  %v1528 = vsel %vm1501, %v1466, 0.0
  %v1529 = vsel %vm1502, %v1467, 0.0
  %v1530 = vsel %vm1502, %v1468, 0.0
  %v1531 = vsel %vm1503, %v1469, 0.0
  %v1532 = vsel %vm1503, %v1470, 0.0
  %v1533 = vsel %vm1504, %v1471, 0.0
  %v1534 = vsel %vm1504, %v1472, 0.0
  %v1535 = vsel %vm1505, %v1473, 0.0
  %v1536 = vsel %vm1505, %v1474, 0.0
  %v1537 = vsel %vm1506, %v1475, 0.0
  %v1538 = vsel %vm1506, %v1476, 0.0
  %v1539 = vmax.f32 %v1507, %v1511
  %v1540 = vmax.f32 %v1509, %v1513
  %v1541 = vmax.f32 %v1539, %v1515
  %v1542 = vmax.f32 %v1540, %v1517
  %v1543 = vmax.f32 %v1541, %v1519
  %v1544 = vmax.f32 %v1542, %v1521
  %v1545 = vmax.f32 %v1543, %v1523
  %v1546 = vmax.f32 %v1544, %v1525
  %v1547 = vmax.f32 %v1545, %v1527
  %v1548 = vmax.f32 %v1546, %v1529
  %v1549 = vmax.f32 %v1547, %v1531
  %v1550 = vmax.f32 %v1548, %v1533
  %v1551 = vmax.f32 %v1549, %v1535
  %v1552 = vmax.f32 %v1550, %v1537
  %v1553 = vmax.f32 %v1551, %v1552
  %v1554 = vmax.f32 %v1508, %v1512
  %v1555 = vmax.f32 %v1510, %v1514
  %v1556 = vmax.f32 %v1554, %v1516
  %v1557 = vmax.f32 %v1555, %v1518
  %v1558 = vmax.f32 %v1556, %v1520
  %v1559 = vmax.f32 %v1557, %v1522
  %v1560 = vmax.f32 %v1558, %v1524
  %v1561 = vmax.f32 %v1559, %v1526
  %v1562 = vmax.f32 %v1560, %v1528
  %v1563 = vmax.f32 %v1561, %v1530
  %v1564 = vmax.f32 %v1562, %v1532
  %v1565 = vmax.f32 %v1563, %v1534
  %v1566 = vmax.f32 %v1564, %v1536
  %v1567 = vmax.f32 %v1565, %v1538
  %v1568 = vmax.f32 %v1566, %v1567
  %v1569 = vld [vmem:[%s3] sm:$0xff]
  %v1570 = vld [vmem:[%s3 + $0x8] sm:$0xff]
  %v1571 = vld [vmem:[%s3 + $0x10] sm:$0xff]
  %v1572 = vld [vmem:[%s3 + $0x18] sm:$0xff]
  %v1573 = vld [vmem:[%s3 + $0x20] sm:$0xff]
  %v1574 = vld [vmem:[%s3 + $0x28] sm:$0xff]
  %v1575 = vld [vmem:[%s3 + $0x30] sm:$0xff]
  %v1576 = vld [vmem:[%s3 + $0x38] sm:$0xff]
  %v1577 = vld [vmem:[%s3 + $0x40] sm:$0xff]
  %v1578 = vld [vmem:[%s3 + $0x48] sm:$0xff]
  %v1579 = vld [vmem:[%s3 + $0x50] sm:$0xff]
  %v1580 = vld [vmem:[%s3 + $0x58] sm:$0xff]
  %v1581 = vld [vmem:[%s3 + $0x60] sm:$0xff]
  %v1582 = vld [vmem:[%s3 + $0x68] sm:$0xff]
  %v1583 = vld [vmem:[%s3 + $0x70] sm:$0xff]
  %v1584 = vld [vmem:[%s3 + $0x78] sm:$0xff]
  %v1585 = vld [vmem:[%s4] sm:$0x1]
  %v1587 = vlaneseq
  %v1588 = vshrl.u32 %v1587, 7
  %v1589 = vsub.s32 0, %v1588
  %v1590 = vrot.slane %v1585, %v1589
  %1592 = vmatprep.subr.mxu0 0.0
  %1593 = vmatpush1.msra.mxu0 %v1569
  %1594 = vmatprep.subr.mxu0 0.0
  %1595 = vmatpush1.msra.mxu0 %v1570
  %1596 = vmatprep.subr.mxu0 0.0
  %1597 = vmatpush1.msra.mxu0 %v1571
  %1598 = vmatprep.subr.mxu0 0.0
  %1599 = vmatpush1.msra.mxu0 %v1572
  %1600 = vmatprep.subr.mxu0 0.0
  %1601 = vmatpush1.msra.mxu0 %v1573
  %1602 = vmatprep.subr.mxu0 0.0
  %1603 = vmatpush1.msra.mxu0 %v1574
  %1604 = vmatprep.subr.mxu0 0.0
  %1605 = vmatpush1.msra.mxu0 %v1575
  %1606 = vmatprep.subr.mxu0 0.0
  %1607 = vmatpush1.msra.mxu0 %v1576
  %1608 = vmatprep.subr.mxu0 0.0
  %1609 = vmatpush1.msra.mxu0 %v1577
  %1610 = vmatprep.subr.mxu0 0.0
  %1611 = vmatpush1.msra.mxu0 %v1578
  %1612 = vmatprep.subr.mxu0 0.0
  %1613 = vmatpush1.msra.mxu0 %v1579
  %1614 = vmatprep.subr.mxu0 0.0
  %1615 = vmatpush1.msra.mxu0 %v1580
  %1616 = vmatprep.subr.mxu0 0.0
  %1617 = vmatpush1.msra.mxu0 %v1581
  %1618 = vmatprep.subr.mxu0 0.0
  %1619 = vmatpush1.msra.mxu0 %v1582
  %1620 = vmatprep.subr.mxu0 0.0
  %1621 = vmatpush1.msra.mxu0 %v1583
  %1622 = vmatprep.subr.mxu0 0.0
  %1623 = vmatpush1.msra.mxu0 %v1584
  %1624 = vmatprep.subr.mxu0 0.0
  %1625 = vmatpush1.msra.mxu0 0.0
  %1626 = vmatprep.subr.mxu0 0.0
  %1627 = vmatpush1.msra.mxu0 0.0
  %1628 = vmatprep.subr.mxu0 0.0
  %1629 = vmatpush1.msra.mxu0 0.0
  %1630 = vmatprep.subr.mxu0 0.0
  %1631 = vmatpush1.msra.mxu0 0.0
  %1632 = vmatprep.subr.mxu0 0.0
  %1633 = vmatpush1.msra.mxu0 0.0
  %1634 = vmatprep.subr.mxu0 0.0
  %1635 = vmatpush1.msra.mxu0 0.0
  %1636 = vmatprep.subr.mxu0 0.0
  %1637 = vmatpush1.msra.mxu0 0.0
  %1638 = vmatprep.subr.mxu0 0.0
  %1639 = vmatpush1.msra.mxu0 0.0
  %1640 = vmatprep.subr.mxu0 0.0
  %1641 = vmatpush1.msra.mxu0 0.0
  %1642 = vmatprep.subr.mxu0 0.0
  %1643 = vmatpush1.msra.mxu0 0.0
  %1644 = vmatprep.subr.mxu0 0.0
  %1645 = vmatpush1.msra.mxu0 0.0
  %1646 = vmatprep.subr.mxu0 0.0
  %1647 = vmatpush1.msra.mxu0 0.0
  %1648 = vmatprep.subr.mxu0 0.0
  %1649 = vmatpush1.msra.mxu0 0.0
  %1650 = vmatprep.subr.mxu0 0.0
  %1651 = vmatpush1.msra.mxu0 0.0
  %1652 = vmatprep.subr.mxu0 0.0
  %1653 = vmatpush1.msra.mxu0 0.0
  %1654 = vmatprep.subr.mxu0 0.0
  %1655 = vmatpush1.msra.mxu0 0.0
  %1656 = vmatprep.mubr.f32.mxu0 0.0
  %1657 = vmatmul.mubr.f32.gmra.mrb[0].mxu0 %v1553
  %v1658 = vpop.f32.mrb[0].mxu0
  %v1659 = vadd.f32 %v1590, %v1658
  %v1660 = vpop.f32.mrb[0].mxu0
  %1661 = vmatprep.mubr.f32.mxu0 0.0
  %1662 = vmatmul.mubr.f32.gmra.mrb[0].mxu0 %v1568
  %v1663 = vpop.f32.mrb[0].mxu0
  %v1664 = vadd.f32 %v1590, %v1663
  %v1665 = vpop.f32.mrb[0].mxu0
  %1666 = vdwg.mxu0
  %1667 = vst [vmem:[%s5] sm:$0xff] %v1659
  %1668 = vst [vmem:[%s5 + $0x8] sm:$0xff] %v1664
  // Predicated region
  $region22: #{cnn_text_forward.1} parent=0 // pred_check
    _
  $region23: #{cnn_text_forward.1} parent=0 // pred_check_branch
    %1670 = sbr.rel (0) target = $region25
  $region24: #{cnn_text_forward.1} parent=0 // pred_region
    _
  $region25: #{cnn_text_forward.1} parent=0 // pred_fallthru
    _
  // Predicated region
  $region26: #{cnn_text_forward.1} parent=0 // pred_check
    _
  $region27: #{cnn_text_forward.1} parent=0 // pred_check_branch
    %1672 = sbr.rel (0) target = $region29
  $region28: #{cnn_text_forward.1} parent=0 // pred_region
    _
  $region29: #{cnn_text_forward.1} parent=0 // pred_fallthru
    _

</llo_original>
